<compile_context>
chip_gen: v7x
topology: tpu7x:2x2x1
jax: 0.10.0
libtpu: 0.0.40
codegen_flags: <defaults>
</compile_context>

<pallas_src>
import math

import jax
import jax.numpy as jnp
import numpy as np
from jax.experimental import pallas as pl
from jax.experimental.pallas import tpu as pltpu


def _window_attention_kernel(x_ref, wq_ref, wk_ref, wv_ref, bq_ref, bv_ref,
                             scale_ref, rpb_ref, wp_ref, bp_ref, o_ref):
    h = pl.program_id(1)
    x = x_ref[0]                                                      # (N, C)

    # Per-head Q/K/V projection (head slicing done via BlockSpec, not in-kernel
    # lane slicing).  k has no bias: qkv_bias = cat(q_bias, zeros, v_bias).
    q = jnp.dot(x, wq_ref[0], preferred_element_type=jnp.float32) + bq_ref[0]
    k = jnp.dot(x, wk_ref[0], preferred_element_type=jnp.float32)
    v = jnp.dot(x, wv_ref[0], preferred_element_type=jnp.float32) + bv_ref[0]

    # Cosine attention: F.normalize(q) @ F.normalize(k)^T  (eps = 1e-12).
    q = q / jnp.maximum(jnp.sqrt(jnp.sum(q * q, axis=-1, keepdims=True)), 1e-12)
    k = k / jnp.maximum(jnp.sqrt(jnp.sum(k * k, axis=-1, keepdims=True)), 1e-12)
    attn = jax.lax.dot_general(q, k, (((1,), (1,)), ((), ())),
                               preferred_element_type=jnp.float32)    # (N, N)

    # Learned per-head logit scale (clamp+exp precomputed, SMEM scalar) and
    # 16*sigmoid(cpb) relative position bias (precomputed per head).
    attn = attn * scale_ref[h] + rpb_ref[0]

    # Numerically stable softmax along the key axis.
    attn = attn - jnp.max(attn, axis=-1, keepdims=True)
    e = jnp.exp(attn)
    p = e / jnp.sum(e, axis=-1, keepdims=True)

    head_out = jnp.dot(p, v, preferred_element_type=jnp.float32)      # (N, hd)
    # Head h's slice of the output projection: accumulate into the resident
    # output block (block-matrix decomposition of concat(heads) @ Wproj^T).
    contrib = jnp.dot(head_out, wp_ref[0],
                      preferred_element_type=jnp.float32)             # (N, C)

    @pl.when(h == 0)
    def _():
        o_ref[0] = bp_ref[...] + contrib

    @pl.when(h != 0)
    def _():
        o_ref[0] = o_ref[0] + contrib


def make_relative_position_bias(window_size, num_heads, cpb_w1, cpb_b1, cpb_w2,
                                pretrained_window_size=(0, 0)):
    """Continuous relative position bias, evaluated host-side in JAX.

    Returns (num_heads, N, N), already passed through 16 * sigmoid(.), ready to
    be added to the attention logits.
    """
    Wh, Ww = window_size
    N = Wh * Ww

    # relative_coords_table (parameter-free buffer, matches the torch __init__)
    rch = np.arange(-(Wh - 1), Wh, dtype=np.float32)
    rcw = np.arange(-(Ww - 1), Ww, dtype=np.float32)
    table = np.stack(np.meshgrid(rch, rcw, indexing="ij"), axis=0)
    table = np.transpose(table, (1, 2, 0))                            # (2Wh-1, 2Ww-1, 2)
    if pretrained_window_size[0] > 0:
        table[..., 0] /= pretrained_window_size[0] - 1
        table[..., 1] /= pretrained_window_size[1] - 1
    else:
        table[..., 0] /= Wh - 1
        table[..., 1] /= Ww - 1
    table *= 8.0
    table = np.sign(table) * np.log2(np.abs(table) + 1.0) / np.log2(8.0)

    # relative_position_index (parameter-free buffer)
    coords = np.stack(np.meshgrid(np.arange(Wh), np.arange(Ww), indexing="ij"))
    coords = coords.reshape(2, -1)                                    # (2, N)
    rel = coords[:, :, None] - coords[:, None, :]                     # (2, N, N)
    rel = np.transpose(rel, (1, 2, 0)).astype(np.int64)               # (N, N, 2)
    rel[..., 0] += Wh - 1
    rel[..., 1] += Ww - 1
    rel[..., 0] *= 2 * Ww - 1
    rpi = rel.sum(-1).reshape(-1)                                     # (N*N,)

    # cpb_mlp: Linear(2, 512) + ReLU + Linear(512, num_heads, bias=False)
    t = jnp.asarray(table.reshape(-1, 2))                             # (T, 2)
    hidden = jnp.maximum(t @ cpb_w1.T + cpb_b1, 0.0)                  # (T, 512)
    tbl = hidden @ cpb_w2.T                                           # (T, nh)
    bias = tbl[rpi].reshape(N, N, num_heads).transpose(2, 0, 1)       # (nh, N, N)
    return 16.0 * jax.nn.sigmoid(bias)


def window_attention_forward(x, p, window_size, num_heads, mask=None):
    """Fused WindowAttention forward.  x: (num_windows*B, N, C) float32."""
    # TODO(synk): the shifted-window `mask` branch and the (p=0.0, eval-mode)
    # attn/proj dropouts are not implemented in the kernel.
    assert mask is None, "mask path not implemented"
    B_, N, C = x.shape
    hd = C // num_heads

    # Host-side layout plumbing only (pure re-packing of the module parameters).
    wT = p["qkv_weight"].T.astype(jnp.float32)                        # (C, 3C)

    def per_head(cols):                                               # (C, C) -> (nh, C, hd)
        return cols.reshape(C, num_heads, hd).transpose(1, 0, 2)

    w_q = per_head(wT[:, :C])
    w_k = per_head(wT[:, C:2 * C])
    w_v = per_head(wT[:, 2 * C:])
    b_q = p["q_bias"].reshape(num_heads, 1, hd).astype(jnp.float32)
    b_v = p["v_bias"].reshape(num_heads, 1, hd).astype(jnp.float32)

    # exp(clamp(logit_scale, max=log(100))) — parameter-only scalar per head.
    scales = jnp.exp(jnp.minimum(p["logit_scale"].reshape(num_heads),
                                 math.log(1.0 / 0.01))).astype(jnp.float32)
    rpb = make_relative_position_bias(window_size, num_heads, p["cpb_w1"],
                                      p["cpb_b1"], p["cpb_w2"]).astype(jnp.float32)
    w_p = p["proj_weight"].T.reshape(num_heads, hd, C).astype(jnp.float32)
    b_p = p["proj_bias"].reshape(1, C).astype(jnp.float32)
    x = x.astype(jnp.float32)

    return pl.pallas_call(
        _window_attention_kernel,
        out_shape=jax.ShapeDtypeStruct((B_, N, C), jnp.float32),
        grid_spec=pltpu.PrefetchScalarGridSpec(
            num_scalar_prefetch=0,
            grid=(B_, num_heads),
            in_specs=[
                pl.BlockSpec((1, N, C), lambda b, h: (b, 0, 0)),      # x (resident per window)
                pl.BlockSpec((1, C, hd), lambda b, h: (h, 0, 0)),     # W_q head h
                pl.BlockSpec((1, C, hd), lambda b, h: (h, 0, 0)),     # W_k head h
                pl.BlockSpec((1, C, hd), lambda b, h: (h, 0, 0)),     # W_v head h
                pl.BlockSpec((1, 1, hd), lambda b, h: (h, 0, 0)),     # q bias head h
                pl.BlockSpec((1, 1, hd), lambda b, h: (h, 0, 0)),     # v bias head h
                pl.BlockSpec(memory_space=pltpu.MemorySpace.SMEM),    # per-head logit scales
                pl.BlockSpec((1, N, N), lambda b, h: (h, 0, 0)),      # rel-pos bias head h
                pl.BlockSpec((1, hd, C), lambda b, h: (h, 0, 0)),     # proj rows head h
                pl.BlockSpec((1, C), lambda b, h: (0, 0)),            # proj bias
            ],
            out_specs=pl.BlockSpec((1, N, C), lambda b, h: (b, 0, 0)),
        ),
        compiler_params=pltpu.CompilerParams(
            dimension_semantics=("parallel", "arbitrary"),
            vmem_limit_bytes=32 * 1024 * 1024,
        ),
    )(x, w_q, w_k, w_v, b_q, b_v, scales, rpb, w_p, b_p)


def reference_forward(x, p, window_size, num_heads):
    """Pure-JAX port of the PyTorch WindowAttention.forward (mask=None)."""
    B_, N, C = x.shape
    hd = C // num_heads
    qkv_bias = jnp.concatenate(
        [p["q_bias"], jnp.zeros_like(p["v_bias"]), p["v_bias"]])
    qkv = x @ p["qkv_weight"].T + qkv_bias
    qkv = qkv.reshape(B_, N, 3, num_heads, hd).transpose(2, 0, 3, 1, 4)
    q, k, v = qkv[0], qkv[1], qkv[2]                                  # (B_, nh, N, hd)
    q = q / jnp.maximum(jnp.sqrt(jnp.sum(q * q, -1, keepdims=True)), 1e-12)
    k = k / jnp.maximum(jnp.sqrt(jnp.sum(k * k, -1, keepdims=True)), 1e-12)
    attn = jnp.einsum("bhnd,bhmd->bhnm", q, k)
    logit_scale = jnp.exp(jnp.minimum(p["logit_scale"], math.log(1.0 / 0.01)))
    attn = attn * logit_scale[None]
    rpb = make_relative_position_bias(window_size, num_heads, p["cpb_w1"],
                                      p["cpb_b1"], p["cpb_w2"])
    attn = attn + rpb[None]
    attn = attn - jnp.max(attn, -1, keepdims=True)
    e = jnp.exp(attn)
    attn = e / jnp.sum(e, -1, keepdims=True)
    out = jnp.einsum("bhnm,bhmd->bhnd", attn, v)
    out = out.transpose(0, 2, 1, 3).reshape(B_, N, C)
    return out @ p["proj_weight"].T + p["proj_bias"]


if __name__ == "__main__":
    # Small shapes consistent with the module's forward:
    #   x: (num_windows*B = 2, N = Wh*Ww = 64, dim = 32), num_heads = 4.
    B_ = 2
    window_size = (8, 8)
    N = window_size[0] * window_size[1]
    dim = 32
    num_heads = 4

    key = jax.random.PRNGKey(0)
    ks = jax.random.split(key, 9)

    params = {
        "qkv_weight": 0.1 * jax.random.normal(ks[0], (3 * dim, dim), jnp.float32),
        "q_bias": 0.1 * jax.random.normal(ks[1], (dim,), jnp.float32),
        "v_bias": 0.1 * jax.random.normal(ks[2], (dim,), jnp.float32),
        "logit_scale": jnp.log(10.0 * jnp.ones((num_heads, 1, 1), jnp.float32)),
        "cpb_w1": 0.1 * jax.random.normal(ks[3], (512, 2), jnp.float32),
        "cpb_b1": 0.1 * jax.random.normal(ks[4], (512,), jnp.float32),
        "cpb_w2": 0.1 * jax.random.normal(ks[5], (num_heads, 512), jnp.float32),
        "proj_weight": 0.1 * jax.random.normal(ks[6], (dim, dim), jnp.float32),
        "proj_bias": 0.1 * jax.random.normal(ks[7], (dim,), jnp.float32),
    }
    x = jax.random.normal(ks[8], (B_, N, dim), dtype=jnp.float32)

    y = window_attention_forward(x, params, window_size, num_heads)
    y = jax.block_until_ready(y)
    y_ref = reference_forward(x, params, window_size, num_heads)

    assert y.shape == (B_, N, dim), y.shape
    max_err = float(jnp.max(jnp.abs(y - y_ref)))
    assert jnp.allclose(y, y_ref, atol=1e-3, rtol=1e-3), max_err
    print("KERNEL_OK")
</pallas_src>

<mosaic_0001>
module attributes {stable_mosaic.version = 11 : i64} {
  func.func @_window_attention_kernel(%arg0: i32, %arg1: i32, %arg2: memref<1x64x32xf32, #tpu.memory_space<vmem>>, %arg3: memref<1x32x8xf32, #tpu.memory_space<vmem>>, %arg4: memref<1x32x8xf32, #tpu.memory_space<vmem>>, %arg5: memref<1x32x8xf32, #tpu.memory_space<vmem>>, %arg6: memref<1x1x8xf32, #tpu.memory_space<vmem>>, %arg7: memref<1x1x8xf32, #tpu.memory_space<vmem>>, %arg8: memref<4xf32, #tpu.memory_space<smem>>, %arg9: memref<1x64x64xf32, #tpu.memory_space<vmem>>, %arg10: memref<1x8x32xf32, #tpu.memory_space<vmem>>, %arg11: memref<1x32xf32, #tpu.memory_space<vmem>>, %arg12: memref<1x64x32xf32, #tpu.memory_space<vmem>>) attributes {dimension_semantics = [#tpu.dimension_semantics<parallel>, #tpu.dimension_semantics<arbitrary>], iteration_bounds = array<i64: 2, 4>, scalar_prefetch = 0 : i64, scratch_operands = 0 : i64, tpu.core_type = #tpu.core_type<tc>, window_params = [{transform_indices = @transform_0, window_bounds = array<i64: 1, 64, 32>}, {transform_indices = @transform_1, window_bounds = array<i64: 1, 32, 8>}, {transform_indices = @transform_2, window_bounds = array<i64: 1, 32, 8>}, {transform_indices = @transform_3, window_bounds = array<i64: 1, 32, 8>}, {transform_indices = @transform_4, window_bounds = array<i64: 1, 1, 8>}, {transform_indices = @transform_5, window_bounds = array<i64: 1, 1, 8>}, {transform_indices = @transform_6, window_bounds = array<i64: 4>}, {transform_indices = @transform_7, window_bounds = array<i64: 1, 64, 64>}, {transform_indices = @transform_8, window_bounds = array<i64: 1, 8, 32>}, {pipeline_mode = #tpu.pipeline_mode<synchronous>, transform_indices = @transform_9, window_bounds = array<i64: 1, 32>}, {transform_indices = @transform_10, window_bounds = array<i64: 1, 64, 32>}]} {
    %c0 = arith.constant 0 : index
    %c0_0 = arith.constant 0 : index
    %c0_1 = arith.constant 0 : index
    %0 = vector.load %arg2[%c0, %c0_0, %c0_1] : memref<1x64x32xf32, #tpu.memory_space<vmem>>, vector<1x64x32xf32>
    %1 = vector.shape_cast %0 : vector<1x64x32xf32> to vector<64x32xf32>
    %c0_2 = arith.constant 0 : index
    %c0_3 = arith.constant 0 : index
    %c0_4 = arith.constant 0 : index
    %2 = vector.load %arg3[%c0_2, %c0_3, %c0_4] : memref<1x32x8xf32, #tpu.memory_space<vmem>>, vector<1x32x8xf32>
    %3 = vector.shape_cast %2 : vector<1x32x8xf32> to vector<32x8xf32>
    %cst = arith.constant dense<0.000000e+00> : vector<64x8xf32>
    %4 = tpu.matmul %1, %3, %cst {dimension_numbers = #tpu.dot_dimension_numbers<[1], [0], [0], [1], [0, 0, 1, 1], [], []>} : vector<64x32xf32>, vector<32x8xf32>, vector<64x8xf32> -> vector<64x8xf32>
    %c0_5 = arith.constant 0 : index
    %c0_6 = arith.constant 0 : index
    %c0_7 = arith.constant 0 : index
    %5 = vector.load %arg6[%c0_5, %c0_6, %c0_7] : memref<1x1x8xf32, #tpu.memory_space<vmem>>, vector<1x1x8xf32>
    %6 = vector.shape_cast %5 : vector<1x1x8xf32> to vector<1x8xf32>
    %7 = vector.broadcast %6 : vector<1x8xf32> to vector<64x8xf32>
    %8 = arith.addf %4, %7 : vector<64x8xf32>
    %c0_8 = arith.constant 0 : index
    %c0_9 = arith.constant 0 : index
    %c0_10 = arith.constant 0 : index
    %9 = vector.load %arg4[%c0_8, %c0_9, %c0_10] : memref<1x32x8xf32, #tpu.memory_space<vmem>>, vector<1x32x8xf32>
    %10 = vector.shape_cast %9 : vector<1x32x8xf32> to vector<32x8xf32>
    %cst_11 = arith.constant dense<0.000000e+00> : vector<64x8xf32>
    %11 = tpu.matmul %1, %10, %cst_11 {dimension_numbers = #tpu.dot_dimension_numbers<[1], [0], [0], [1], [0, 0, 1, 1], [], []>} : vector<64x32xf32>, vector<32x8xf32>, vector<64x8xf32> -> vector<64x8xf32>
    %c0_12 = arith.constant 0 : index
    %c0_13 = arith.constant 0 : index
    %c0_14 = arith.constant 0 : index
    %12 = vector.load %arg5[%c0_12, %c0_13, %c0_14] : memref<1x32x8xf32, #tpu.memory_space<vmem>>, vector<1x32x8xf32>
    %13 = vector.shape_cast %12 : vector<1x32x8xf32> to vector<32x8xf32>
    %cst_15 = arith.constant dense<0.000000e+00> : vector<64x8xf32>
    %14 = tpu.matmul %1, %13, %cst_15 {dimension_numbers = #tpu.dot_dimension_numbers<[1], [0], [0], [1], [0, 0, 1, 1], [], []>} : vector<64x32xf32>, vector<32x8xf32>, vector<64x8xf32> -> vector<64x8xf32>
    %c0_16 = arith.constant 0 : index
    %c0_17 = arith.constant 0 : index
    %c0_18 = arith.constant 0 : index
    %15 = vector.load %arg7[%c0_16, %c0_17, %c0_18] : memref<1x1x8xf32, #tpu.memory_space<vmem>>, vector<1x1x8xf32>
    %16 = vector.shape_cast %15 : vector<1x1x8xf32> to vector<1x8xf32>
    %17 = vector.broadcast %16 : vector<1x8xf32> to vector<64x8xf32>
    %18 = arith.addf %14, %17 : vector<64x8xf32>
    %19 = arith.mulf %8, %8 : vector<64x8xf32>
    %cst_19 = arith.constant dense<0.000000e+00> : vector<64xf32>
    %20 = vector.multi_reduction <add>, %19, %cst_19 [1] : vector<64x8xf32> to vector<64xf32>
    %21 = vector.shape_cast %20 : vector<64xf32> to vector<64x1xf32>
    %22 = math.sqrt %21 : vector<64x1xf32>
    %cst_20 = arith.constant 9.99999996E-13 : f32
    %23 = vector.broadcast %cst_20 : f32 to vector<64x1xf32>
    %24 = arith.maximumf %22, %23 : vector<64x1xf32>
    %25 = vector.broadcast %24 : vector<64x1xf32> to vector<64x8xf32>
    %26 = arith.divf %8, %25 : vector<64x8xf32>
    %27 = arith.mulf %11, %11 : vector<64x8xf32>
    %cst_21 = arith.constant dense<0.000000e+00> : vector<64xf32>
    %28 = vector.multi_reduction <add>, %27, %cst_21 [1] : vector<64x8xf32> to vector<64xf32>
    %29 = vector.shape_cast %28 : vector<64xf32> to vector<64x1xf32>
    %30 = math.sqrt %29 : vector<64x1xf32>
    %cst_22 = arith.constant 9.99999996E-13 : f32
    %31 = vector.broadcast %cst_22 : f32 to vector<64x1xf32>
    %32 = arith.maximumf %30, %31 : vector<64x1xf32>
    %33 = vector.broadcast %32 : vector<64x1xf32> to vector<64x8xf32>
    %34 = arith.divf %11, %33 : vector<64x8xf32>
    %cst_23 = arith.constant dense<0.000000e+00> : vector<64x64xf32>
    %35 = tpu.matmul %26, %34, %cst_23 {dimension_numbers = #tpu.dot_dimension_numbers<[1], [1], [0], [0], [0, 0, 1, 0], [], []>} : vector<64x8xf32>, vector<64x8xf32>, vector<64x64xf32> -> vector<64x64xf32>
    %36 = arith.index_cast %arg1 : i32 to index
    %37 = memref.load %arg8[%36] : memref<4xf32, #tpu.memory_space<smem>>
    %38 = vector.broadcast %37 : f32 to vector<64x64xf32>
    %39 = arith.mulf %35, %38 : vector<64x64xf32>
    %c0_24 = arith.constant 0 : index
    %c0_25 = arith.constant 0 : index
    %c0_26 = arith.constant 0 : index
    %40 = vector.load %arg9[%c0_24, %c0_25, %c0_26] : memref<1x64x64xf32, #tpu.memory_space<vmem>>, vector<1x64x64xf32>
    %41 = vector.shape_cast %40 : vector<1x64x64xf32> to vector<64x64xf32>
    %42 = arith.addf %39, %41 : vector<64x64xf32>
    %cst_27 = arith.constant dense<0xFF800000> : vector<64xf32>
    %43 = vector.multi_reduction <maximumf>, %42, %cst_27 [1] : vector<64x64xf32> to vector<64xf32>
    %44 = vector.shape_cast %43 : vector<64xf32> to vector<64x1xf32>
    %45 = vector.broadcast %44 : vector<64x1xf32> to vector<64x64xf32>
    %46 = arith.subf %42, %45 : vector<64x64xf32>
    %47 = math.exp %46 : vector<64x64xf32>
    %cst_28 = arith.constant dense<0.000000e+00> : vector<64xf32>
    %48 = vector.multi_reduction <add>, %47, %cst_28 [1] : vector<64x64xf32> to vector<64xf32>
    %49 = vector.shape_cast %48 : vector<64xf32> to vector<64x1xf32>
    %50 = vector.broadcast %49 : vector<64x1xf32> to vector<64x64xf32>
    %51 = arith.divf %47, %50 : vector<64x64xf32>
    %cst_29 = arith.constant dense<0.000000e+00> : vector<64x8xf32>
    %52 = tpu.matmul %51, %18, %cst_29 {dimension_numbers = #tpu.dot_dimension_numbers<[1], [0], [0], [1], [0, 0, 1, 1], [], []>} : vector<64x64xf32>, vector<64x8xf32>, vector<64x8xf32> -> vector<64x8xf32>
    %c0_30 = arith.constant 0 : index
    %c0_31 = arith.constant 0 : index
    %c0_32 = arith.constant 0 : index
    %53 = vector.load %arg10[%c0_30, %c0_31, %c0_32] : memref<1x8x32xf32, #tpu.memory_space<vmem>>, vector<1x8x32xf32>
    %54 = vector.shape_cast %53 : vector<1x8x32xf32> to vector<8x32xf32>
    %cst_33 = arith.constant dense<0.000000e+00> : vector<64x32xf32>
    %55 = tpu.matmul %52, %54, %cst_33 {dimension_numbers = #tpu.dot_dimension_numbers<[1], [0], [0], [1], [0, 0, 1, 1], [], []>} : vector<64x8xf32>, vector<8x32xf32>, vector<64x32xf32> -> vector<64x32xf32>
    %c0_i32 = arith.constant 0 : i32
    %56 = arith.cmpi eq, %arg1, %c0_i32 : i32
    %57 = arith.extui %56 : i1 to i32
    %c0_i32_34 = arith.constant 0 : i32
    %58 = arith.cmpi ne, %57, %c0_i32_34 : i32
    scf.if %58 {
      %c0_37 = arith.constant 0 : index
      %c0_38 = arith.constant 0 : index
      %62 = vector.load %arg11[%c0_37, %c0_38] : memref<1x32xf32, #tpu.memory_space<vmem>>, vector<1x32xf32>
      %63 = vector.broadcast %62 : vector<1x32xf32> to vector<64x32xf32>
      %64 = arith.addf %63, %55 : vector<64x32xf32>
      %c0_39 = arith.constant 0 : index
      %c0_40 = arith.constant 0 : index
      %c0_41 = arith.constant 0 : index
      %65 = vector.load %arg12[%c0_39, %c0_40, %c0_41] : memref<1x64x32xf32, #tpu.memory_space<vmem>>, vector<1x64x32xf32>
      %66 = vector.shape_cast %65 : vector<1x64x32xf32> to vector<64x32xf32>
      %67 = vector.shape_cast %64 : vector<64x32xf32> to vector<1x64x32xf32>
      tpu.vector_store %arg12[%c0_39, %c0_40, %c0_41], %67 {strides = array<i32>} : memref<1x64x32xf32, #tpu.memory_space<vmem>>, vector<1x64x32xf32>,
    } else {
    }
    %c0_i32_35 = arith.constant 0 : i32
    %59 = arith.cmpi ne, %arg1, %c0_i32_35 : i32
    %60 = arith.extui %59 : i1 to i32
    %c0_i32_36 = arith.constant 0 : i32
    %61 = arith.cmpi ne, %60, %c0_i32_36 : i32
    scf.if %61 {
      %c0_37 = arith.constant 0 : index
      %c0_38 = arith.constant 0 : index
      %c0_39 = arith.constant 0 : index
      %62 = vector.load %arg12[%c0_37, %c0_38, %c0_39] : memref<1x64x32xf32, #tpu.memory_space<vmem>>, vector<1x64x32xf32>
      %63 = vector.shape_cast %62 : vector<1x64x32xf32> to vector<64x32xf32>
      %64 = arith.addf %63, %55 : vector<64x32xf32>
      %c0_40 = arith.constant 0 : index
      %c0_41 = arith.constant 0 : index
      %c0_42 = arith.constant 0 : index
      %65 = vector.load %arg12[%c0_40, %c0_41, %c0_42] : memref<1x64x32xf32, #tpu.memory_space<vmem>>, vector<1x64x32xf32>
      %66 = vector.shape_cast %65 : vector<1x64x32xf32> to vector<64x32xf32>
      %67 = vector.shape_cast %64 : vector<64x32xf32> to vector<1x64x32xf32>
      tpu.vector_store %arg12[%c0_40, %c0_41, %c0_42], %67 {strides = array<i32>} : memref<1x64x32xf32, #tpu.memory_space<vmem>>, vector<1x64x32xf32>,
    } else {
    }
    return
  }
  func.func @transform_0(%arg0: i32, %arg1: i32) -> (i32, i32, i32) {
    %c0_i32 = arith.constant 0 : i32
    %c0_i32_0 = arith.constant 0 : i32
    %c0_i32_1 = arith.constant 0 : i32
    return %arg0, %c0_i32, %c0_i32_0 : i32, i32, i32
  }
  func.func @transform_1(%arg0: i32, %arg1: i32) -> (i32, i32, i32) {
    %c0_i32 = arith.constant 0 : i32
    %c0_i32_0 = arith.constant 0 : i32
    %c0_i32_1 = arith.constant 0 : i32
    return %arg1, %c0_i32, %c0_i32_0 : i32, i32, i32
  }
  func.func @transform_2(%arg0: i32, %arg1: i32) -> (i32, i32, i32) {
    %c0_i32 = arith.constant 0 : i32
    %c0_i32_0 = arith.constant 0 : i32
    %c0_i32_1 = arith.constant 0 : i32
    return %arg1, %c0_i32, %c0_i32_0 : i32, i32, i32
  }
  func.func @transform_3(%arg0: i32, %arg1: i32) -> (i32, i32, i32) {
    %c0_i32 = arith.constant 0 : i32
    %c0_i32_0 = arith.constant 0 : i32
    %c0_i32_1 = arith.constant 0 : i32
    return %arg1, %c0_i32, %c0_i32_0 : i32, i32, i32
  }
  func.func @transform_4(%arg0: i32, %arg1: i32) -> (i32, i32, i32) {
    %c0_i32 = arith.constant 0 : i32
    %c0_i32_0 = arith.constant 0 : i32
    %c0_i32_1 = arith.constant 0 : i32
    return %arg1, %c0_i32, %c0_i32_0 : i32, i32, i32
  }
  func.func @transform_5(%arg0: i32, %arg1: i32) -> (i32, i32, i32) {
    %c0_i32 = arith.constant 0 : i32
    %c0_i32_0 = arith.constant 0 : i32
    %c0_i32_1 = arith.constant 0 : i32
    return %arg1, %c0_i32, %c0_i32_0 : i32, i32, i32
  }
  func.func @transform_6(%arg0: i32, %arg1: i32) -> i32 {
    %c0_i32 = arith.constant 0 : i32
    %c0_i32_0 = arith.constant 0 : i32
    return %c0_i32 : i32
  }
  func.func @transform_7(%arg0: i32, %arg1: i32) -> (i32, i32, i32) {
    %c0_i32 = arith.constant 0 : i32
    %c0_i32_0 = arith.constant 0 : i32
    %c0_i32_1 = arith.constant 0 : i32
    return %arg1, %c0_i32, %c0_i32_0 : i32, i32, i32
  }
  func.func @transform_8(%arg0: i32, %arg1: i32) -> (i32, i32, i32) {
    %c0_i32 = arith.constant 0 : i32
    %c0_i32_0 = arith.constant 0 : i32
    %c0_i32_1 = arith.constant 0 : i32
    return %arg1, %c0_i32, %c0_i32_0 : i32, i32, i32
  }
  func.func @transform_9(%arg0: i32, %arg1: i32) -> (i32, i32) {
    %c0_i32 = arith.constant 0 : i32
    %c0_i32_0 = arith.constant 0 : i32
    %c0_i32_1 = arith.constant 0 : i32
    return %c0_i32, %c0_i32_0 : i32, i32
  }
  func.func @transform_10(%arg0: i32, %arg1: i32) -> (i32, i32, i32) {
    %c0_i32 = arith.constant 0 : i32
    %c0_i32_0 = arith.constant 0 : i32
    %c0_i32_1 = arith.constant 0 : i32
    return %arg0, %c0_i32, %c0_i32_0 : i32, i32, i32
  }
}

</mosaic_0001>

<llo_original>
// kernel: tpu_custom_call.1
$region0: #{tpu_custom_call.1}
  #allocation0 [shape = 'u32[]', space=smem, size = 0x4, offset = 0x4, fixed_abs, tag = 'smem constant byte address 0x4 - core index']
  #allocation1 [shape = 'u32[144,128]{1,0:T(1,128)}', space=vmem, size = 0x12000, scoped, tag = 'internal scratch']
  %s0 = inlined_call_operand.vmem [shape: f32[2,64,32], index: 0, kind: input, shape index: {}]
  %s1 = inlined_call_operand.vmem [shape: f32[4,32,8], index: 1, kind: input, shape index: {}]
  %s2 = inlined_call_operand.vmem [shape: f32[4,32,8], index: 2, kind: input, shape index: {}]
  %s3 = inlined_call_operand.vmem [shape: f32[4,32,8], index: 3, kind: input, shape index: {}]
  %s4 = inlined_call_operand.vmem [shape: f32[4,1,8], index: 4, kind: input, shape index: {}]
  %s5 = inlined_call_operand.vmem [shape: f32[4,1,8], index: 5, kind: input, shape index: {}]
  %s6 = inlined_call_operand.vmem [shape: f32[4], index: 6, kind: input, shape index: {}]
  %s7 = inlined_call_operand.vmem [shape: f32[4,64,64], index: 7, kind: input, shape index: {}]
  %s8 = inlined_call_operand.vmem [shape: f32[4,8,32], index: 8, kind: input, shape index: {}]
  %s9 = inlined_call_operand.vmem [shape: f32[1,32], index: 9, kind: input, shape index: {}]
  %s10 = inlined_call_operand.vmem [shape: f32[2,64,32], index: 10, kind: output, shape index: {}]
  %s11 = sld [smem:[#allocation0]]
  $region85: #{tpu_custom_call.1} parent=0
    _
  %s13 = ssub.s32 1, %s11
  %s14 = scalar_select 0, %s13, %s11
  $region1: #{tpu_custom_call.1} parent=0
    #allocation2 [shape = 'u8[512]{0}', space=smem, size = 0x200, scoped, tag = 'input window, operand 6, single buffered']
    #allocation3 [shape = 's32[2]{0}', space=sflag, size = 0x8, scoped, tag = 'scoped memory for tpu_custom_call.1']
    %15 = vsyncpa [#allocation3], 0
    loop: start=0, step=1, limit=10
    $region2: #{tpu_custom_call.1} parent=1 // loop_pre_header
      _
    $region3: #{tpu_custom_call.1} parent=1 // loop_header
      %s17 = sphi 0, %s21
      %p18 = scmp.ge.s32.totalorder %s17, 10
      %s24 = sphi 0, %s36
      %s25 = sphi 0, %s32
      %s26 = sphi 0, %s24
      %s27 = sphi 0, %s25
      %s28 = sphi 0, %s26
      %s29 = sphi 0, %s27
      %s39 = sphi 0, %s41
      %s42 = sphi 0, %s39
      %s43 = sphi 0, %s42
      %s59 = sphi 0, %s43
      %s65 = sphi 0, %s67
      %s68 = sphi 0, %s65
      %s69 = sphi 0, %s68
      %s85 = sphi 0, %s69
      %s91 = sphi 0, %s93
      %s94 = sphi 0, %s91
      %s95 = sphi 0, %s94
      %s111 = sphi 0, %s95
      %s117 = sphi 0, %s119
      %s120 = sphi 0, %s117
      %s121 = sphi 0, %s120
      %s137 = sphi 0, %s121
      %s143 = sphi 0, %s145
      %s146 = sphi 0, %s143
      %s147 = sphi 0, %s146
      %s163 = sphi 0, %s147
      %s169 = sphi 0, %s171
      %s172 = sphi 0, %s169
      %s173 = sphi 0, %s172
      %s189 = sphi 0, %s173
      %s193 = sphi 0, %s193
      %s195 = sphi 0, %s193
      %s196 = sphi 0, %s195
      %s210 = sphi 0, %s196
      %s216 = sphi 0, %s218
      %s219 = sphi 0, %s216
      %s220 = sphi 0, %s219
      %s236 = sphi 0, %s220
      %s242 = sphi 0, %s244
      %s245 = sphi 0, %s242
      %s246 = sphi 0, %s245
      %s262 = sphi 0, %s246
      %s266 = sphi 0, %s266
      %s268 = sphi 0, %s266
      %s269 = sphi 0, %s268
      %s283 = sphi 0, %s269
      %s289 = sphi 0, %s291
      %s292 = sphi 0, %s289
      %s293 = sphi 0, %s292
      %s309 = sphi 0, %s293
    $region4: #{tpu_custom_call.1} parent=1 // loop_header_branch
      %20 = sbr.rel (%p18) target = $region8
    $region5: #{tpu_custom_call.1} parent=1 // loop_body
      %s22 = ssub.s32 %s17, 1
      %s23 = ssub.s32 %s17, 2
      %s30 = sadd.s32 1, %s25
      %p31 = scmp.ge.s32.totalorder %s30, 4
      %s32 = scalar_select %p31, 0, %s30
      %s33 = sadd.s32 1, %s24
      %s34 = scalar_select %p31, %s33, %s24
      %p35 = scmp.ge.s32.totalorder %s34, 2
      %s36 = scalar_select %p35, 0, %s34
      %s37 = ssub.s32 %s24, %s36
      %p38 = scmp.eq.s32.totalorder %s37, 0
      %s40 = sadd.s32 %s39, 1
      %s41 = scalar_select %p38, %s39, %s40
      %p44 = pneg %p38
      %p45 = scmp.eq.s32.totalorder %s17, 7
      %p46 = por %p44, %p45
      %p47 = scmp.ne.s32.totalorder %s39, %s42
      %p48 = scmp.eq.s32.totalorder %s17, 0
      %p49 = por %p47, %p48
      %p50 = scmp.ne.s32.totalorder %s39, %s42
      %p51 = scmp.eq.s32.totalorder %s22, 7
      %p52 = por %p50, %p51
      %p53 = scmp.ne.s32.totalorder %s42, %s43
      %p54 = scmp.eq.s32.totalorder %s22, 0
      %p55 = por %p53, %p54
      %p56 = scmp.ne.s32.totalorder %s42, %s43
      %p57 = scmp.eq.s32.totalorder %s23, 7
      %p58 = por %p56, %p57
      %p60 = scmp.ne.s32.totalorder %s43, %s59
      %p61 = scmp.eq.s32.totalorder %s23, 0
      %p62 = por %p60, %p61
      %s63 = ssub.s32 %s25, %s32
      %p64 = scmp.eq.s32.totalorder %s63, 0
      %s66 = sadd.s32 %s65, 1
      %s67 = scalar_select %p64, %s65, %s66
      %p70 = pneg %p64
      %p71 = scmp.eq.s32.totalorder %s17, 7
      %p72 = por %p70, %p71
      %p73 = scmp.ne.s32.totalorder %s65, %s68
      %p74 = scmp.eq.s32.totalorder %s17, 0
      %p75 = por %p73, %p74
      %p76 = scmp.ne.s32.totalorder %s65, %s68
      %p77 = scmp.eq.s32.totalorder %s22, 7
      %p78 = por %p76, %p77
      %p79 = scmp.ne.s32.totalorder %s68, %s69
      %p80 = scmp.eq.s32.totalorder %s22, 0
      %p81 = por %p79, %p80
      %p82 = scmp.ne.s32.totalorder %s68, %s69
      %p83 = scmp.eq.s32.totalorder %s23, 7
      %p84 = por %p82, %p83
      %p86 = scmp.ne.s32.totalorder %s69, %s85
      %p87 = scmp.eq.s32.totalorder %s23, 0
      %p88 = por %p86, %p87
      %s89 = ssub.s32 %s25, %s32
      %p90 = scmp.eq.s32.totalorder %s89, 0
      %s92 = sadd.s32 %s91, 1
      %s93 = scalar_select %p90, %s91, %s92
      %p96 = pneg %p90
      %p97 = scmp.eq.s32.totalorder %s17, 7
      %p98 = por %p96, %p97
      %p99 = scmp.ne.s32.totalorder %s91, %s94
      %p100 = scmp.eq.s32.totalorder %s17, 0
      %p101 = por %p99, %p100
      %p102 = scmp.ne.s32.totalorder %s91, %s94
      %p103 = scmp.eq.s32.totalorder %s22, 7
      %p104 = por %p102, %p103
      %p105 = scmp.ne.s32.totalorder %s94, %s95
      %p106 = scmp.eq.s32.totalorder %s22, 0
      %p107 = por %p105, %p106
      %p108 = scmp.ne.s32.totalorder %s94, %s95
      %p109 = scmp.eq.s32.totalorder %s23, 7
      %p110 = por %p108, %p109
      %p112 = scmp.ne.s32.totalorder %s95, %s111
      %p113 = scmp.eq.s32.totalorder %s23, 0
      %p114 = por %p112, %p113
      %s115 = ssub.s32 %s25, %s32
      %p116 = scmp.eq.s32.totalorder %s115, 0
      %s118 = sadd.s32 %s117, 1
      %s119 = scalar_select %p116, %s117, %s118
      %p122 = pneg %p116
      %p123 = scmp.eq.s32.totalorder %s17, 7
      %p124 = por %p122, %p123
      %p125 = scmp.ne.s32.totalorder %s117, %s120
      %p126 = scmp.eq.s32.totalorder %s17, 0
      %p127 = por %p125, %p126
      %p128 = scmp.ne.s32.totalorder %s117, %s120
      %p129 = scmp.eq.s32.totalorder %s22, 7
      %p130 = por %p128, %p129
      %p131 = scmp.ne.s32.totalorder %s120, %s121
      %p132 = scmp.eq.s32.totalorder %s22, 0
      %p133 = por %p131, %p132
      %p134 = scmp.ne.s32.totalorder %s120, %s121
      %p135 = scmp.eq.s32.totalorder %s23, 7
      %p136 = por %p134, %p135
      %p138 = scmp.ne.s32.totalorder %s121, %s137
      %p139 = scmp.eq.s32.totalorder %s23, 0
      %p140 = por %p138, %p139
      %s141 = ssub.s32 %s25, %s32
      %p142 = scmp.eq.s32.totalorder %s141, 0
      %s144 = sadd.s32 %s143, 1
      %s145 = scalar_select %p142, %s143, %s144
      %p148 = pneg %p142
      %p149 = scmp.eq.s32.totalorder %s17, 7
      %p150 = por %p148, %p149
      %p151 = scmp.ne.s32.totalorder %s143, %s146
      %p152 = scmp.eq.s32.totalorder %s17, 0
      %p153 = por %p151, %p152
      %p154 = scmp.ne.s32.totalorder %s143, %s146
      %p155 = scmp.eq.s32.totalorder %s22, 7
      %p156 = por %p154, %p155
      %p157 = scmp.ne.s32.totalorder %s146, %s147
      %p158 = scmp.eq.s32.totalorder %s22, 0
      %p159 = por %p157, %p158
      %p160 = scmp.ne.s32.totalorder %s146, %s147
      %p161 = scmp.eq.s32.totalorder %s23, 7
      %p162 = por %p160, %p161
      %p164 = scmp.ne.s32.totalorder %s147, %s163
      %p165 = scmp.eq.s32.totalorder %s23, 0
      %p166 = por %p164, %p165
      %s167 = ssub.s32 %s25, %s32
      %p168 = scmp.eq.s32.totalorder %s167, 0
      %s170 = sadd.s32 %s169, 1
      %s171 = scalar_select %p168, %s169, %s170
      %p174 = pneg %p168
      %p175 = scmp.eq.s32.totalorder %s17, 7
      %p176 = por %p174, %p175
      %p177 = scmp.ne.s32.totalorder %s169, %s172
      %p178 = scmp.eq.s32.totalorder %s17, 0
      %p179 = por %p177, %p178
      %p180 = scmp.ne.s32.totalorder %s169, %s172
      %p181 = scmp.eq.s32.totalorder %s22, 7
      %p182 = por %p180, %p181
      %p183 = scmp.ne.s32.totalorder %s172, %s173
      %p184 = scmp.eq.s32.totalorder %s22, 0
      %p185 = por %p183, %p184
      %p186 = scmp.ne.s32.totalorder %s172, %s173
      %p187 = scmp.eq.s32.totalorder %s23, 7
      %p188 = por %p186, %p187
      %p190 = scmp.ne.s32.totalorder %s173, %s189
      %p191 = scmp.eq.s32.totalorder %s23, 0
      %p192 = por %p190, %p191
      %s194 = sadd.s32 %s193, 1
      %p197 = scmp.eq.s32.totalorder %s17, 7
      %p198 = scmp.ne.s32.totalorder %s193, %s195
      %p199 = scmp.eq.s32.totalorder %s17, 0
      %p200 = por %p198, %p199
      %p201 = scmp.ne.s32.totalorder %s193, %s195
      %p202 = scmp.eq.s32.totalorder %s22, 7
      %p203 = por %p201, %p202
      %p204 = scmp.ne.s32.totalorder %s195, %s196
      %p205 = scmp.eq.s32.totalorder %s22, 0
      %p206 = por %p204, %p205
      %p207 = scmp.ne.s32.totalorder %s195, %s196
      %p208 = scmp.eq.s32.totalorder %s23, 7
      %p209 = por %p207, %p208
      %p211 = scmp.ne.s32.totalorder %s196, %s210
      %p212 = scmp.eq.s32.totalorder %s23, 0
      %p213 = por %p211, %p212
      %s214 = ssub.s32 %s25, %s32
      %p215 = scmp.eq.s32.totalorder %s214, 0
      %s217 = sadd.s32 %s216, 1
      %s218 = scalar_select %p215, %s216, %s217
      %p221 = pneg %p215
      %p222 = scmp.eq.s32.totalorder %s17, 7
      %p223 = por %p221, %p222
      %p224 = scmp.ne.s32.totalorder %s216, %s219
      %p225 = scmp.eq.s32.totalorder %s17, 0
      %p226 = por %p224, %p225
      %p227 = scmp.ne.s32.totalorder %s216, %s219
      %p228 = scmp.eq.s32.totalorder %s22, 7
      %p229 = por %p227, %p228
      %p230 = scmp.ne.s32.totalorder %s219, %s220
      %p231 = scmp.eq.s32.totalorder %s22, 0
      %p232 = por %p230, %p231
      %p233 = scmp.ne.s32.totalorder %s219, %s220
      %p234 = scmp.eq.s32.totalorder %s23, 7
      %p235 = por %p233, %p234
      %p237 = scmp.ne.s32.totalorder %s220, %s236
      %p238 = scmp.eq.s32.totalorder %s23, 0
      %p239 = por %p237, %p238
      %s240 = ssub.s32 %s25, %s32
      %p241 = scmp.eq.s32.totalorder %s240, 0
      %s243 = sadd.s32 %s242, 1
      %s244 = scalar_select %p241, %s242, %s243
      %p247 = pneg %p241
      %p248 = scmp.eq.s32.totalorder %s17, 7
      %p249 = por %p247, %p248
      %p250 = scmp.ne.s32.totalorder %s242, %s245
      %p251 = scmp.eq.s32.totalorder %s17, 0
      %p252 = por %p250, %p251
      %p253 = scmp.ne.s32.totalorder %s242, %s245
      %p254 = scmp.eq.s32.totalorder %s22, 7
      %p255 = por %p253, %p254
      %p256 = scmp.ne.s32.totalorder %s245, %s246
      %p257 = scmp.eq.s32.totalorder %s22, 0
      %p258 = por %p256, %p257
      %p259 = scmp.ne.s32.totalorder %s245, %s246
      %p260 = scmp.eq.s32.totalorder %s23, 7
      %p261 = por %p259, %p260
      %p263 = scmp.ne.s32.totalorder %s246, %s262
      %p264 = scmp.eq.s32.totalorder %s23, 0
      %p265 = por %p263, %p264
      %s267 = sadd.s32 %s266, 1
      %p270 = scmp.eq.s32.totalorder %s17, 7
      %p271 = scmp.ne.s32.totalorder %s266, %s268
      %p272 = scmp.eq.s32.totalorder %s17, 0
      %p273 = por %p271, %p272
      %p274 = scmp.ne.s32.totalorder %s266, %s268
      %p275 = scmp.eq.s32.totalorder %s22, 7
      %p276 = por %p274, %p275
      %p277 = scmp.ne.s32.totalorder %s268, %s269
      %p278 = scmp.eq.s32.totalorder %s22, 0
      %p279 = por %p277, %p278
      %p280 = scmp.ne.s32.totalorder %s268, %s269
      %p281 = scmp.eq.s32.totalorder %s23, 7
      %p282 = por %p280, %p281
      %p284 = scmp.ne.s32.totalorder %s269, %s283
      %p285 = scmp.eq.s32.totalorder %s23, 0
      %p286 = por %p284, %p285
      %s287 = ssub.s32 %s24, %s36
      %p288 = scmp.eq.s32.totalorder %s287, 0
      %s290 = sadd.s32 %s289, 1
      %s291 = scalar_select %p288, %s289, %s290
      %p294 = pneg %p288
      %p295 = scmp.eq.s32.totalorder %s17, 7
      %p296 = por %p294, %p295
      %p297 = scmp.ne.s32.totalorder %s289, %s292
      %p298 = scmp.eq.s32.totalorder %s17, 0
      %p299 = por %p297, %p298
      %p300 = scmp.ne.s32.totalorder %s289, %s292
      %p301 = scmp.eq.s32.totalorder %s22, 7
      %p302 = por %p300, %p301
      %p303 = scmp.ne.s32.totalorder %s292, %s293
      %p304 = scmp.eq.s32.totalorder %s22, 0
      %p305 = por %p303, %p304
      %p306 = scmp.ne.s32.totalorder %s292, %s293
      %p307 = scmp.eq.s32.totalorder %s23, 7
      %p308 = por %p306, %p307
      %p310 = scmp.ne.s32.totalorder %s293, %s309
      %p311 = scmp.eq.s32.totalorder %s23, 0
      %p312 = por %p310, %p311
      %p313 = scmp.le.s32.totalorder 1, %s17
      %p314 = scmp.lt.s32.totalorder %s17, 9
      %p315 = pnand %p313, %p314
      %p316 = pneg %p315
      // Predicated region
      $region9: #{tpu_custom_call.1} parent=5 // pred_check
        _
      $region10: #{tpu_custom_call.1} parent=5 // pred_check_branch
        %318 = sbr.rel (%p315) target = $region12
      $region11: #{tpu_custom_call.1} parent=5 // pred_region
        %s319 = ssub.s32 %s17, 1
        // Predicated region
        $region13: #{tpu_custom_call.1} parent=11 // pred_check
          %p320 = pneg %p206
        $region14: #{tpu_custom_call.1} parent=11 // pred_check_branch
          %322 = sbr.rel (%p320) target = $region16
        $region15: #{tpu_custom_call.1} parent=11 // pred_region
          %s324 = ssub.s32 16, 16
          %325 = vsyncadd [#allocation3], %s324
          %s327 = sshll.u32 %s6, 4
          %s328 = int_to_ptr.vmem [resolvable:$true] %s327
          %330 = dma.vmem_to_smem %s328, 16, [#allocation2], [#allocation3]
        $region16: #{tpu_custom_call.1} parent=11 // pred_fallthru
          _
        // Predicated region
        $region17: #{tpu_custom_call.1} parent=11 // pred_check
          %p331 = pneg %p279
        $region18: #{tpu_custom_call.1} parent=11 // pred_check_branch
          %333 = sbr.rel (%p331) target = $region20
        $region19: #{tpu_custom_call.1} parent=11 // pred_region
          _
        $region20: #{tpu_custom_call.1} parent=11 // pred_fallthru
          _
      $region12: #{tpu_custom_call.1} parent=5 // pred_fallthru
        _
      %p334 = scmp.lt.s32.totalorder %s17, 8
      // Predicated region
      $region21: #{tpu_custom_call.1} parent=5 // pred_check
        %p335 = pneg %p334
      $region22: #{tpu_custom_call.1} parent=5 // pred_check_branch
        %337 = sbr.rel (%p335) target = $region24
      $region23: #{tpu_custom_call.1} parent=5 // pred_region
        // Predicated region
        $region25: #{tpu_custom_call.1} parent=23 // pred_check
          %p338 = pneg %p49
        $region26: #{tpu_custom_call.1} parent=23 // pred_check_branch
          %340 = sbr.rel (%p338) target = $region28
        $region27: #{tpu_custom_call.1} parent=23 // pred_region
          %p341 = scmp.lt.s32.totalorder %s24, 1
          %s342 = scalar_select %p341, %s24, 1
          %s343 = smul.addr %s342, 8
          %s344 = smul.addr %s343, 8
          %s345 = scalar_lea.vmem %s0, %s344
        $region28: #{tpu_custom_call.1} parent=23 // pred_fallthru
          _
        // Predicated region
        $region29: #{tpu_custom_call.1} parent=23 // pred_check
          %p346 = pneg %p75
        $region30: #{tpu_custom_call.1} parent=23 // pred_check_branch
          %348 = sbr.rel (%p346) target = $region32
        $region31: #{tpu_custom_call.1} parent=23 // pred_region
          %p349 = scmp.lt.s32.totalorder %s25, 3
          %s350 = scalar_select %p349, %s25, 3
          %s351 = smul.addr %s350, 4
          %s352 = smul.addr %s351, 8
          %s353 = scalar_lea.vmem %s1, %s352
        $region32: #{tpu_custom_call.1} parent=23 // pred_fallthru
          _
        // Predicated region
        $region33: #{tpu_custom_call.1} parent=23 // pred_check
          %p354 = pneg %p101
        $region34: #{tpu_custom_call.1} parent=23 // pred_check_branch
          %356 = sbr.rel (%p354) target = $region36
        $region35: #{tpu_custom_call.1} parent=23 // pred_region
          %p357 = scmp.lt.s32.totalorder %s25, 3
          %s358 = scalar_select %p357, %s25, 3
          %s359 = smul.addr %s358, 4
          %s360 = smul.addr %s359, 8
          %s361 = scalar_lea.vmem %s2, %s360
        $region36: #{tpu_custom_call.1} parent=23 // pred_fallthru
          _
        // Predicated region
        $region37: #{tpu_custom_call.1} parent=23 // pred_check
          %p362 = pneg %p127
        $region38: #{tpu_custom_call.1} parent=23 // pred_check_branch
          %364 = sbr.rel (%p362) target = $region40
        $region39: #{tpu_custom_call.1} parent=23 // pred_region
          %p365 = scmp.lt.s32.totalorder %s25, 3
          %s366 = scalar_select %p365, %s25, 3
          %s367 = smul.addr %s366, 4
          %s368 = smul.addr %s367, 8
          %s369 = scalar_lea.vmem %s3, %s368
        $region40: #{tpu_custom_call.1} parent=23 // pred_fallthru
          _
        // Predicated region
        $region41: #{tpu_custom_call.1} parent=23 // pred_check
          %p370 = pneg %p153
        $region42: #{tpu_custom_call.1} parent=23 // pred_check_branch
          %372 = sbr.rel (%p370) target = $region44
        $region43: #{tpu_custom_call.1} parent=23 // pred_region
          %p373 = scmp.lt.s32.totalorder %s25, 3
          %s374 = scalar_select %p373, %s25, 3
          %s375 = scalar_lea.vmem %s4, %s374
        $region44: #{tpu_custom_call.1} parent=23 // pred_fallthru
          _
        // Predicated region
        $region45: #{tpu_custom_call.1} parent=23 // pred_check
          %p376 = pneg %p179
        $region46: #{tpu_custom_call.1} parent=23 // pred_check_branch
          %378 = sbr.rel (%p376) target = $region48
        $region47: #{tpu_custom_call.1} parent=23 // pred_region
          %p379 = scmp.lt.s32.totalorder %s25, 3
          %s380 = scalar_select %p379, %s25, 3
          %s381 = scalar_lea.vmem %s5, %s380
        $region48: #{tpu_custom_call.1} parent=23 // pred_fallthru
          _
        // Predicated region
        $region49: #{tpu_custom_call.1} parent=23 // pred_check
          %p382 = pneg %p226
        $region50: #{tpu_custom_call.1} parent=23 // pred_check_branch
          %384 = sbr.rel (%p382) target = $region52
        $region51: #{tpu_custom_call.1} parent=23 // pred_region
          %p385 = scmp.lt.s32.totalorder %s25, 3
          %s386 = scalar_select %p385, %s25, 3
          %s387 = smul.addr %s386, 8
          %s388 = smul.addr %s387, 8
          %s389 = scalar_lea.vmem %s7, %s388
        $region52: #{tpu_custom_call.1} parent=23 // pred_fallthru
          _
        // Predicated region
        $region53: #{tpu_custom_call.1} parent=23 // pred_check
          %p390 = pneg %p252
        $region54: #{tpu_custom_call.1} parent=23 // pred_check_branch
          %392 = sbr.rel (%p390) target = $region56
        $region55: #{tpu_custom_call.1} parent=23 // pred_region
          %p393 = scmp.lt.s32.totalorder %s25, 3
          %s394 = scalar_select %p393, %s25, 3
          %s395 = smul.addr %s394, 8
          %s396 = scalar_lea.vmem %s8, %s395
        $region56: #{tpu_custom_call.1} parent=23 // pred_fallthru
          _
      $region24: #{tpu_custom_call.1} parent=5 // pred_fallthru
        _
      %p397 = scmp.le.s32.totalorder 1, %s17
      %p398 = scmp.lt.s32.totalorder %s17, 9
      %p399 = pnand %p397, %p398
      %p400 = pneg %p399
      // Predicated region
      $region57: #{tpu_custom_call.1} parent=5 // pred_check
        _
      $region58: #{tpu_custom_call.1} parent=5 // pred_check_branch
        %402 = sbr.rel (%p399) target = $region60
      $region59: #{tpu_custom_call.1} parent=5 // pred_region
        %s403 = ssub.s32 %s17, 1
        // Predicated region
        $region61: #{tpu_custom_call.1} parent=59 // pred_check
          %p404 = pneg %p206
        $region62: #{tpu_custom_call.1} parent=59 // pred_check_branch
          %406 = sbr.rel (%p404) target = $region64
        $region63: #{tpu_custom_call.1} parent=59 // pred_region
          %407 = dma.done [#allocation3], 16
        $region64: #{tpu_custom_call.1} parent=59 // pred_fallthru
          _
        %408 = sfence
        %p409 = scmp.lt.s32.totalorder %s26, 1
        %s410 = scalar_select %p409, %s26, 1
        %s411 = smul.addr %s410, 8
        %s412 = smul.addr %s411, 8
        %s413 = scalar_lea.vmem %s0, %s412
        %p414 = pneg %p55
        %p415 = pneg %p52
        %p416 = scmp.lt.s32.totalorder %s27, 3
        %s417 = scalar_select %p416, %s27, 3
        %s418 = smul.addr %s417, 4
        %s419 = smul.addr %s418, 8
        %s420 = scalar_lea.vmem %s1, %s419
        %p421 = pneg %p81
        %p422 = pneg %p78
        %p423 = scmp.lt.s32.totalorder %s27, 3
        %s424 = scalar_select %p423, %s27, 3
        %s425 = smul.addr %s424, 4
        %s426 = smul.addr %s425, 8
        %s427 = scalar_lea.vmem %s2, %s426
        %p428 = pneg %p107
        %p429 = pneg %p104
        %p430 = scmp.lt.s32.totalorder %s27, 3
        %s431 = scalar_select %p430, %s27, 3
        %s432 = smul.addr %s431, 4
        %s433 = smul.addr %s432, 8
        %s434 = scalar_lea.vmem %s3, %s433
        %p435 = pneg %p133
        %p436 = pneg %p130
        %p437 = scmp.lt.s32.totalorder %s27, 3
        %s438 = scalar_select %p437, %s27, 3
        %s439 = scalar_lea.vmem %s4, %s438
        %p440 = pneg %p159
        %p441 = pneg %p156
        %p442 = scmp.lt.s32.totalorder %s27, 3
        %s443 = scalar_select %p442, %s27, 3
        %s444 = scalar_lea.vmem %s5, %s443
        %p445 = pneg %p185
        %p446 = pneg %p182
        %p447 = pneg %p206
        %p448 = pneg %p203
        %p449 = scmp.lt.s32.totalorder %s27, 3
        %s450 = scalar_select %p449, %s27, 3
        %s451 = smul.addr %s450, 8
        %s452 = smul.addr %s451, 8
        %s453 = scalar_lea.vmem %s7, %s452
        %p454 = pneg %p232
        %p455 = pneg %p229
        %p456 = scmp.lt.s32.totalorder %s27, 3
        %s457 = scalar_select %p456, %s27, 3
        %s458 = smul.addr %s457, 8
        %s459 = scalar_lea.vmem %s8, %s458
        %p460 = pneg %p258
        %p461 = pneg %p255
        %p462 = pneg %p279
        %p463 = pneg %p276
        %p464 = pneg %p305
        %p465 = pneg %p302
        %p466 = scmp.lt.s32.totalorder %s26, 1
        %s467 = scalar_select %p466, %s26, 1
        %s468 = smul.addr %s467, 8
        %s469 = smul.addr %s468, 8
        %s470 = scalar_lea.vmem %s10, %s469
        %p471 = scmp.lt.s32.totalorder %s26, 1
        %s472 = scalar_select %p471, %s26, 1
        %s473 = smul.addr %s472, 8
        %s474 = smul.addr %s473, 8
        %s475 = scalar_lea.vmem %s0, %s474
        %p476 = scmp.lt.s32.totalorder %s27, 3
        %s477 = scalar_select %p476, %s27, 3
        %s478 = smul.addr %s477, 4
        %s479 = smul.addr %s478, 8
        %s480 = scalar_lea.vmem %s1, %s479
        %p481 = scmp.lt.s32.totalorder %s27, 3
        %s482 = scalar_select %p481, %s27, 3
        %s483 = smul.addr %s482, 4
        %s484 = smul.addr %s483, 8
        %s485 = scalar_lea.vmem %s2, %s484
        %p486 = scmp.lt.s32.totalorder %s27, 3
        %s487 = scalar_select %p486, %s27, 3
        %s488 = smul.addr %s487, 4
        %s489 = smul.addr %s488, 8
        %s490 = scalar_lea.vmem %s3, %s489
        %p491 = scmp.lt.s32.totalorder %s27, 3
        %s492 = scalar_select %p491, %s27, 3
        %s493 = scalar_lea.vmem %s4, %s492
        %p494 = scmp.lt.s32.totalorder %s27, 3
        %s495 = scalar_select %p494, %s27, 3
        %s496 = scalar_lea.vmem %s5, %s495
        %p497 = scmp.lt.s32.totalorder %s27, 3
        %s498 = scalar_select %p497, %s27, 3
        %s499 = smul.addr %s498, 8
        %s500 = smul.addr %s499, 8
        %s501 = scalar_lea.vmem %s7, %s500
        %p502 = scmp.lt.s32.totalorder %s27, 3
        %s503 = scalar_select %p502, %s27, 3
        %s504 = smul.addr %s503, 8
        %s505 = scalar_lea.vmem %s8, %s504
        %p506 = scmp.lt.s32.totalorder %s26, 1
        %s507 = scalar_select %p506, %s26, 1
        %s508 = smul.addr %s507, 8
        %s509 = smul.addr %s508, 8
        %s510 = scalar_lea.vmem %s10, %s509
        %v511 = vld [vmem:[%s475] sm:$0xff]
        %v512 = vld [vmem:[%s475 + $0x8] sm:$0xff]
        %v513 = vld [vmem:[%s475 + $0x10] sm:$0xff]
        %v514 = vld [vmem:[%s475 + $0x18] sm:$0xff]
        %v515 = vld [vmem:[%s475 + $0x20] sm:$0xff]
        %v516 = vld [vmem:[%s475 + $0x28] sm:$0xff]
        %v517 = vld [vmem:[%s475 + $0x30] sm:$0xff]
        %v518 = vld [vmem:[%s475 + $0x38] sm:$0xff]
        %v519 = vld [vmem:[%s480] sm:$0xff]
        %v520 = vld [vmem:[%s480 + $0x8] sm:$0xff]
        %v521 = vld [vmem:[%s480 + $0x10] sm:$0xff]
        %v522 = vld [vmem:[%s480 + $0x18] sm:$0xff]
        %v523 = vld [vmem:[%s493] sm:$0x1]
        %v525 = vlaneseq
        %v526 = vshrl.u32 %v525, 7
        %v527 = vsub.s32 0, %v526
        %v528 = vrot.slane %v523, %v527
        %vm530 = vcmask 261120
        %v532 = vsel %vm530, %v511, 0
        %v535 = vsel %vm530, %v512, 0
        %v538 = vsel %vm530, %v513, 0
        %v541 = vsel %vm530, %v514, 0
        %v544 = vsel %vm530, %v515, 0
        %v547 = vsel %vm530, %v516, 0
        %v550 = vsel %vm530, %v517, 0
        %v553 = vsel %vm530, %v518, 0
        %555 = vmatprep.subr.mxu0 0.0
        %556 = vmatpush1.msra.mxu0 %v519
        %557 = vmatprep.subr.mxu0 0.0
        %558 = vmatpush1.msra.mxu0 %v520
        %559 = vmatprep.subr.mxu0 0.0
        %560 = vmatpush1.msra.mxu0 %v521
        %561 = vmatprep.subr.mxu0 0.0
        %562 = vmatpush1.msra.mxu0 %v522
        %563 = vmatprep.subr.mxu0 0.0
        %564 = vmatpush1.msra.mxu0 0.0
        %565 = vmatprep.subr.mxu0 0.0
        %566 = vmatpush1.msra.mxu0 0.0
        %567 = vmatprep.subr.mxu0 0.0
        %568 = vmatpush1.msra.mxu0 0.0
        %569 = vmatprep.subr.mxu0 0.0
        %570 = vmatpush1.msra.mxu0 0.0
        %571 = vmatprep.subr.mxu0 0.0
        %572 = vmatpush1.msra.mxu0 0.0
        %573 = vmatprep.subr.mxu0 0.0
        %574 = vmatpush1.msra.mxu0 0.0
        %575 = vmatprep.subr.mxu0 0.0
        %576 = vmatpush1.msra.mxu0 0.0
        %577 = vmatprep.subr.mxu0 0.0
        %578 = vmatpush1.msra.mxu0 0.0
        %579 = vmatprep.subr.mxu0 0.0
        %580 = vmatpush1.msra.mxu0 0.0
        %581 = vmatprep.subr.mxu0 0.0
        %582 = vmatpush1.msra.mxu0 0.0
        %583 = vmatprep.subr.mxu0 0.0
        %584 = vmatpush1.msra.mxu0 0.0
        %585 = vmatprep.subr.mxu0 0.0
        %586 = vmatpush1.msra.mxu0 0.0
        %587 = vmatprep.subr.mxu0 0.0
        %588 = vmatpush1.msra.mxu0 0.0
        %589 = vmatprep.subr.mxu0 0.0
        %590 = vmatpush1.msra.mxu0 0.0
        %591 = vmatprep.subr.mxu0 0.0
        %592 = vmatpush1.msra.mxu0 0.0
        %593 = vmatprep.subr.mxu0 0.0
        %594 = vmatpush1.msra.mxu0 0.0
        %595 = vmatprep.subr.mxu0 0.0
        %596 = vmatpush1.msra.mxu0 0.0
        %597 = vmatprep.subr.mxu0 0.0
        %598 = vmatpush1.msra.mxu0 0.0
        %599 = vmatprep.subr.mxu0 0.0
        %600 = vmatpush1.msra.mxu0 0.0
        %601 = vmatprep.subr.mxu0 0.0
        %602 = vmatpush1.msra.mxu0 0.0
        %603 = vmatprep.subr.mxu0 0.0
        %604 = vmatpush1.msra.mxu0 0.0
        %605 = vmatprep.subr.mxu0 0.0
        %606 = vmatpush1.msra.mxu0 0.0
        %607 = vmatprep.subr.mxu0 0.0
        %608 = vmatpush1.msra.mxu0 0.0
        %609 = vmatprep.subr.mxu0 0.0
        %610 = vmatpush1.msra.mxu0 0.0
        %611 = vmatprep.subr.mxu0 0.0
        %612 = vmatpush1.msra.mxu0 0.0
        %613 = vmatprep.subr.mxu0 0.0
        %614 = vmatpush1.msra.mxu0 0.0
        %615 = vmatprep.subr.mxu0 0.0
        %616 = vmatpush1.msra.mxu0 0.0
        %617 = vmatprep.subr.mxu0 0.0
        %618 = vmatpush1.msra.mxu0 0.0
        %619 = vmatprep.mubr.f32.mxu0 0.0
        %620 = vmatmul.mubr.f32.gmra.mrb[0].mxu0 %v532
        %v621 = vpop.f32.mrb[0].mxu0
        %v622 = vadd.f32 %v528, %v621
        %v623 = vpop.f32.mrb[0].mxu0
        %624 = vmatprep.mubr.f32.mxu0 0.0
        %625 = vmatmul.mubr.f32.gmra.mrb[0].mxu0 %v535
        %v626 = vpop.f32.mrb[0].mxu0
        %v627 = vadd.f32 %v528, %v626
        %v628 = vpop.f32.mrb[0].mxu0
        %629 = vmatprep.mubr.f32.mxu0 0.0
        %630 = vmatmul.mubr.f32.gmra.mrb[0].mxu0 %v538
        %v631 = vpop.f32.mrb[0].mxu0
        %v632 = vadd.f32 %v528, %v631
        %v633 = vpop.f32.mrb[0].mxu0
        %634 = vmatprep.mubr.f32.mxu0 0.0
        %635 = vmatmul.mubr.f32.gmra.mrb[0].mxu0 %v541
        %v636 = vpop.f32.mrb[0].mxu0
        %v637 = vadd.f32 %v528, %v636
        %v638 = vpop.f32.mrb[0].mxu0
        %639 = vmatprep.mubr.f32.mxu0 0.0
        %640 = vmatmul.mubr.f32.gmra.mrb[0].mxu0 %v544
        %v641 = vpop.f32.mrb[0].mxu0
        %v642 = vadd.f32 %v528, %v641
        %v643 = vpop.f32.mrb[0].mxu0
        %644 = vmatprep.mubr.f32.mxu0 0.0
        %645 = vmatmul.mubr.f32.gmra.mrb[0].mxu0 %v547
        %v646 = vpop.f32.mrb[0].mxu0
        %v647 = vadd.f32 %v528, %v646
        %v648 = vpop.f32.mrb[0].mxu0
        %649 = vmatprep.mubr.f32.mxu0 0.0
        %650 = vmatmul.mubr.f32.gmra.mrb[0].mxu0 %v550
        %v651 = vpop.f32.mrb[0].mxu0
        %v652 = vadd.f32 %v528, %v651
        %v653 = vpop.f32.mrb[0].mxu0
        %654 = vmatprep.mubr.f32.mxu0 0.0
        %655 = vmatmul.mubr.f32.gmra.mrb[0].mxu0 %v553
        %v656 = vpop.f32.mrb[0].mxu0
        %v657 = vadd.f32 %v528, %v656
        %v658 = vpop.f32.mrb[0].mxu0
        %659 = vdwg.mxu0
        %v660 = vld [vmem:[%s485] sm:$0xff]
        %v661 = vld [vmem:[%s485 + $0x8] sm:$0xff]
        %v662 = vld [vmem:[%s485 + $0x10] sm:$0xff]
        %v663 = vld [vmem:[%s485 + $0x18] sm:$0xff]
        %664 = vmatprep.subr.mxu0 0.0
        %665 = vmatpush1.msra.mxu0 %v660
        %666 = vmatprep.subr.mxu0 0.0
        %667 = vmatpush1.msra.mxu0 %v661
        %668 = vmatprep.subr.mxu0 0.0
        %669 = vmatpush1.msra.mxu0 %v662
        %670 = vmatprep.subr.mxu0 0.0
        %671 = vmatpush1.msra.mxu0 %v663
        %672 = vmatprep.subr.mxu0 0.0
        %673 = vmatpush1.msra.mxu0 0.0
        %674 = vmatprep.subr.mxu0 0.0
        %675 = vmatpush1.msra.mxu0 0.0
        %676 = vmatprep.subr.mxu0 0.0
        %677 = vmatpush1.msra.mxu0 0.0
        %678 = vmatprep.subr.mxu0 0.0
        %679 = vmatpush1.msra.mxu0 0.0
        %680 = vmatprep.subr.mxu0 0.0
        %681 = vmatpush1.msra.mxu0 0.0
        %682 = vmatprep.subr.mxu0 0.0
        %683 = vmatpush1.msra.mxu0 0.0
        %684 = vmatprep.subr.mxu0 0.0
        %685 = vmatpush1.msra.mxu0 0.0
        %686 = vmatprep.subr.mxu0 0.0
        %687 = vmatpush1.msra.mxu0 0.0
        %688 = vmatprep.subr.mxu0 0.0
        %689 = vmatpush1.msra.mxu0 0.0
        %690 = vmatprep.subr.mxu0 0.0
        %691 = vmatpush1.msra.mxu0 0.0
        %692 = vmatprep.subr.mxu0 0.0
        %693 = vmatpush1.msra.mxu0 0.0
        %694 = vmatprep.subr.mxu0 0.0
        %695 = vmatpush1.msra.mxu0 0.0
        %696 = vmatprep.subr.mxu0 0.0
        %697 = vmatpush1.msra.mxu0 0.0
        %698 = vmatprep.subr.mxu0 0.0
        %699 = vmatpush1.msra.mxu0 0.0
        %700 = vmatprep.subr.mxu0 0.0
        %701 = vmatpush1.msra.mxu0 0.0
        %702 = vmatprep.subr.mxu0 0.0
        %703 = vmatpush1.msra.mxu0 0.0
        %704 = vmatprep.subr.mxu0 0.0
        %705 = vmatpush1.msra.mxu0 0.0
        %706 = vmatprep.subr.mxu0 0.0
        %707 = vmatpush1.msra.mxu0 0.0
        %708 = vmatprep.subr.mxu0 0.0
        %709 = vmatpush1.msra.mxu0 0.0
        %710 = vmatprep.subr.mxu0 0.0
        %711 = vmatpush1.msra.mxu0 0.0
        %712 = vmatprep.subr.mxu0 0.0
        %713 = vmatpush1.msra.mxu0 0.0
        %714 = vmatprep.subr.mxu0 0.0
        %715 = vmatpush1.msra.mxu0 0.0
        %716 = vmatprep.subr.mxu0 0.0
        %717 = vmatpush1.msra.mxu0 0.0
        %718 = vmatprep.subr.mxu0 0.0
        %719 = vmatpush1.msra.mxu0 0.0
        %720 = vmatprep.subr.mxu0 0.0
        %721 = vmatpush1.msra.mxu0 0.0
        %722 = vmatprep.subr.mxu0 0.0
        %723 = vmatpush1.msra.mxu0 0.0
        %724 = vmatprep.subr.mxu0 0.0
        %725 = vmatpush1.msra.mxu0 0.0
        %726 = vmatprep.subr.mxu0 0.0
        %727 = vmatpush1.msra.mxu0 0.0
        %728 = vmatprep.mubr.f32.mxu0 0.0
        %729 = vmatmul.mubr.f32.gmra.mrb[0].mxu0 %v532
        %v730 = vpop.f32.mrb[0].mxu0
        %v731 = vadd.f32 0.0, %v730
        %v732 = vpop.f32.mrb[0].mxu0
        %733 = vmatprep.mubr.f32.mxu0 0.0
        %734 = vmatmul.mubr.f32.gmra.mrb[0].mxu0 %v535
        %v735 = vpop.f32.mrb[0].mxu0
        %v736 = vadd.f32 0.0, %v735
        %v737 = vpop.f32.mrb[0].mxu0
        %738 = vmatprep.mubr.f32.mxu0 0.0
        %739 = vmatmul.mubr.f32.gmra.mrb[0].mxu0 %v538
        %v740 = vpop.f32.mrb[0].mxu0
        %v741 = vadd.f32 0.0, %v740
        %v742 = vpop.f32.mrb[0].mxu0
        %743 = vmatprep.mubr.f32.mxu0 0.0
        %744 = vmatmul.mubr.f32.gmra.mrb[0].mxu0 %v541
        %v745 = vpop.f32.mrb[0].mxu0
        %v746 = vadd.f32 0.0, %v745
        %v747 = vpop.f32.mrb[0].mxu0
        %748 = vmatprep.mubr.f32.mxu0 0.0
        %749 = vmatmul.mubr.f32.gmra.mrb[0].mxu0 %v544
        %v750 = vpop.f32.mrb[0].mxu0
        %v751 = vadd.f32 0.0, %v750
        %v752 = vpop.f32.mrb[0].mxu0
        %753 = vmatprep.mubr.f32.mxu0 0.0
        %754 = vmatmul.mubr.f32.gmra.mrb[0].mxu0 %v547
        %v755 = vpop.f32.mrb[0].mxu0
        %v756 = vadd.f32 0.0, %v755
        %v757 = vpop.f32.mrb[0].mxu0
        %758 = vmatprep.mubr.f32.mxu0 0.0
        %759 = vmatmul.mubr.f32.gmra.mrb[0].mxu0 %v550
        %v760 = vpop.f32.mrb[0].mxu0
        %v761 = vadd.f32 0.0, %v760
        %v762 = vpop.f32.mrb[0].mxu0
        %763 = vmatprep.mubr.f32.mxu0 0.0
        %764 = vmatmul.mubr.f32.gmra.mrb[0].mxu0 %v553
        %v765 = vpop.f32.mrb[0].mxu0
        %v766 = vadd.f32 0.0, %v765
        %v767 = vpop.f32.mrb[0].mxu0
        %768 = vdwg.mxu0
        %v769 = vld [vmem:[%s490] sm:$0xff]
        %v770 = vld [vmem:[%s490 + $0x8] sm:$0xff]
        %v771 = vld [vmem:[%s490 + $0x10] sm:$0xff]
        %v772 = vld [vmem:[%s490 + $0x18] sm:$0xff]
        %v773 = vld [vmem:[%s496] sm:$0x1]
        %v775 = vlaneseq
        %v776 = vshrl.u32 %v775, 7
        %v777 = vsub.s32 0, %v776
        %v778 = vrot.slane %v773, %v777
        %780 = vmatprep.subr.mxu0 0.0
        %781 = vmatpush1.msra.mxu0 %v769
        %782 = vmatprep.subr.mxu0 0.0
        %783 = vmatpush1.msra.mxu0 %v770
        %784 = vmatprep.subr.mxu0 0.0
        %785 = vmatpush1.msra.mxu0 %v771
        %786 = vmatprep.subr.mxu0 0.0
        %787 = vmatpush1.msra.mxu0 %v772
        %788 = vmatprep.subr.mxu0 0.0
        %789 = vmatpush1.msra.mxu0 0.0
        %790 = vmatprep.subr.mxu0 0.0
        %791 = vmatpush1.msra.mxu0 0.0
        %792 = vmatprep.subr.mxu0 0.0
        %793 = vmatpush1.msra.mxu0 0.0
        %794 = vmatprep.subr.mxu0 0.0
        %795 = vmatpush1.msra.mxu0 0.0
        %796 = vmatprep.subr.mxu0 0.0
        %797 = vmatpush1.msra.mxu0 0.0
        %798 = vmatprep.subr.mxu0 0.0
        %799 = vmatpush1.msra.mxu0 0.0
        %800 = vmatprep.subr.mxu0 0.0
        %801 = vmatpush1.msra.mxu0 0.0
        %802 = vmatprep.subr.mxu0 0.0
        %803 = vmatpush1.msra.mxu0 0.0
        %804 = vmatprep.subr.mxu0 0.0
        %805 = vmatpush1.msra.mxu0 0.0
        %806 = vmatprep.subr.mxu0 0.0
        %807 = vmatpush1.msra.mxu0 0.0
        %808 = vmatprep.subr.mxu0 0.0
        %809 = vmatpush1.msra.mxu0 0.0
        %810 = vmatprep.subr.mxu0 0.0
        %811 = vmatpush1.msra.mxu0 0.0
        %812 = vmatprep.subr.mxu0 0.0
        %813 = vmatpush1.msra.mxu0 0.0
        %814 = vmatprep.subr.mxu0 0.0
        %815 = vmatpush1.msra.mxu0 0.0
        %816 = vmatprep.subr.mxu0 0.0
        %817 = vmatpush1.msra.mxu0 0.0
        %818 = vmatprep.subr.mxu0 0.0
        %819 = vmatpush1.msra.mxu0 0.0
        %820 = vmatprep.subr.mxu0 0.0
        %821 = vmatpush1.msra.mxu0 0.0
        %822 = vmatprep.subr.mxu0 0.0
        %823 = vmatpush1.msra.mxu0 0.0
        %824 = vmatprep.subr.mxu0 0.0
        %825 = vmatpush1.msra.mxu0 0.0
        %826 = vmatprep.subr.mxu0 0.0
        %827 = vmatpush1.msra.mxu0 0.0
        %828 = vmatprep.subr.mxu0 0.0
        %829 = vmatpush1.msra.mxu0 0.0
        %830 = vmatprep.subr.mxu0 0.0
        %831 = vmatpush1.msra.mxu0 0.0
        %832 = vmatprep.subr.mxu0 0.0
        %833 = vmatpush1.msra.mxu0 0.0
        %834 = vmatprep.subr.mxu0 0.0
        %835 = vmatpush1.msra.mxu0 0.0
        %836 = vmatprep.subr.mxu0 0.0
        %837 = vmatpush1.msra.mxu0 0.0
        %838 = vmatprep.subr.mxu0 0.0
        %839 = vmatpush1.msra.mxu0 0.0
        %840 = vmatprep.subr.mxu0 0.0
        %841 = vmatpush1.msra.mxu0 0.0
        %842 = vmatprep.subr.mxu0 0.0
        %843 = vmatpush1.msra.mxu0 0.0
        %844 = vmatprep.mubr.f32.mxu0 0.0
        %845 = vmatmul.mubr.f32.gmra.mrb[0].mxu0 %v532
        %v846 = vpop.f32.mrb[0].mxu0
        %v847 = vadd.f32 %v778, %v846
        %v848 = vpop.f32.mrb[0].mxu0
        %849 = vmatprep.mubr.f32.mxu0 0.0
        %850 = vmatmul.mubr.f32.gmra.mrb[0].mxu0 %v535
        %v851 = vpop.f32.mrb[0].mxu0
        %v852 = vadd.f32 %v778, %v851
        %v853 = vpop.f32.mrb[0].mxu0
        %854 = vmatprep.mubr.f32.mxu0 0.0
        %855 = vmatmul.mubr.f32.gmra.mrb[0].mxu0 %v538
        %v856 = vpop.f32.mrb[0].mxu0
        %v857 = vadd.f32 %v778, %v856
        %v858 = vpop.f32.mrb[0].mxu0
        %859 = vmatprep.mubr.f32.mxu0 0.0
        %860 = vmatmul.mubr.f32.gmra.mrb[0].mxu0 %v541
        %v861 = vpop.f32.mrb[0].mxu0
        %v862 = vadd.f32 %v778, %v861
        %v863 = vpop.f32.mrb[0].mxu0
        %864 = vmatprep.mubr.f32.mxu0 0.0
        %865 = vmatmul.mubr.f32.gmra.mrb[0].mxu0 %v544
        %v866 = vpop.f32.mrb[0].mxu0
        %v867 = vadd.f32 %v778, %v866
        %v868 = vpop.f32.mrb[0].mxu0
        %869 = vmatprep.mubr.f32.mxu0 0.0
        %870 = vmatmul.mubr.f32.gmra.mrb[0].mxu0 %v547
        %v871 = vpop.f32.mrb[0].mxu0
        %v872 = vadd.f32 %v778, %v871
        %v873 = vpop.f32.mrb[0].mxu0
        %874 = vmatprep.mubr.f32.mxu0 0.0
        %875 = vmatmul.mubr.f32.gmra.mrb[0].mxu0 %v550
        %v876 = vpop.f32.mrb[0].mxu0
        %v877 = vadd.f32 %v778, %v876
        %v878 = vpop.f32.mrb[0].mxu0
        %879 = vmatprep.mubr.f32.mxu0 0.0
        %880 = vmatmul.mubr.f32.gmra.mrb[0].mxu0 %v553
        %v881 = vpop.f32.mrb[0].mxu0
        %v882 = vadd.f32 %v778, %v881
        %v883 = vpop.f32.mrb[0].mxu0
        %884 = vdwg.mxu0
        %v885 = vmul.f32 %v622, %v622
        %v886 = vmul.f32 %v627, %v627
        %v887 = vmul.f32 %v632, %v632
        %v888 = vmul.f32 %v637, %v637
        %v889 = vmul.f32 %v642, %v642
        %v890 = vmul.f32 %v647, %v647
        %v891 = vmul.f32 %v652, %v652
        %v892 = vmul.f32 %v657, %v657
        %vm893 = vcmask 64512
        %v894 = vsel %vm893, %v885, 0.0
        %895 = vadd.xlane.f32.xlu0 %v894
        %v896 = vpop.xlane.xlu0 %895
        %v897 = vsel %vm893, %v886, 0.0
        %898 = vadd.xlane.f32.xlu0 %v897
        %v899 = vpop.xlane.xlu0 %898
        %v900 = vsel %vm893, %v887, 0.0
        %901 = vadd.xlane.f32.xlu0 %v900
        %v902 = vpop.xlane.xlu0 %901
        %v903 = vsel %vm893, %v888, 0.0
        %904 = vadd.xlane.f32.xlu0 %v903
        %v905 = vpop.xlane.xlu0 %904
        %v906 = vsel %vm893, %v889, 0.0
        %907 = vadd.xlane.f32.xlu0 %v906
        %v908 = vpop.xlane.xlu0 %907
        %v909 = vsel %vm893, %v890, 0.0
        %910 = vadd.xlane.f32.xlu0 %v909
        %v911 = vpop.xlane.xlu0 %910
        %v912 = vsel %vm893, %v891, 0.0
        %913 = vadd.xlane.f32.xlu0 %v912
        %v914 = vpop.xlane.xlu0 %913
        %v915 = vsel %vm893, %v892, 0.0
        %916 = vadd.xlane.f32.xlu0 %v915
        %v917 = vpop.xlane.xlu0 %916
        %v918 = vrsqrt.pop %v896
        %v919 = vmul.f32 %v896, %v918
        %vm920 = vcmp.eq.f32.partialorder %v896, inf
        %v921 = vsel %vm920, %v896, %v919
        %vm922 = vcmp.eq.f32.partialorder %v896, 0.0
        %v923 = vand.u32 %v896, 2147483648
        %v924 = vsel %vm922, %v923, %v921
        %v925 = vrsqrt.pop %v899
        %v926 = vmul.f32 %v899, %v925
        %vm927 = vcmp.eq.f32.partialorder %v899, inf
        %v928 = vsel %vm927, %v899, %v926
        %vm929 = vcmp.eq.f32.partialorder %v899, 0.0
        %v930 = vand.u32 %v899, 2147483648
        %v931 = vsel %vm929, %v930, %v928
        %v932 = vrsqrt.pop %v902
        %v933 = vmul.f32 %v902, %v932
        %vm934 = vcmp.eq.f32.partialorder %v902, inf
        %v935 = vsel %vm934, %v902, %v933
        %vm936 = vcmp.eq.f32.partialorder %v902, 0.0
        %v937 = vand.u32 %v902, 2147483648
        %v938 = vsel %vm936, %v937, %v935
        %v939 = vrsqrt.pop %v905
        %v940 = vmul.f32 %v905, %v939
        %vm941 = vcmp.eq.f32.partialorder %v905, inf
        %v942 = vsel %vm941, %v905, %v940
        %vm943 = vcmp.eq.f32.partialorder %v905, 0.0
        %v944 = vand.u32 %v905, 2147483648
        %v945 = vsel %vm943, %v944, %v942
        %v946 = vrsqrt.pop %v908
        %v947 = vmul.f32 %v908, %v946
        %vm948 = vcmp.eq.f32.partialorder %v908, inf
        %v949 = vsel %vm948, %v908, %v947
        %vm950 = vcmp.eq.f32.partialorder %v908, 0.0
        %v951 = vand.u32 %v908, 2147483648
        %v952 = vsel %vm950, %v951, %v949
        %v953 = vrsqrt.pop %v911
        %v954 = vmul.f32 %v911, %v953
        %vm955 = vcmp.eq.f32.partialorder %v911, inf
        %v956 = vsel %vm955, %v911, %v954
        %vm957 = vcmp.eq.f32.partialorder %v911, 0.0
        %v958 = vand.u32 %v911, 2147483648
        %v959 = vsel %vm957, %v958, %v956
        %v960 = vrsqrt.pop %v914
        %v961 = vmul.f32 %v914, %v960
        %vm962 = vcmp.eq.f32.partialorder %v914, inf
        %v963 = vsel %vm962, %v914, %v961
        %vm964 = vcmp.eq.f32.partialorder %v914, 0.0
        %v965 = vand.u32 %v914, 2147483648
        %v966 = vsel %vm964, %v965, %v963
        %v967 = vrsqrt.pop %v917
        %v968 = vmul.f32 %v917, %v967
        %vm969 = vcmp.eq.f32.partialorder %v917, inf
        %v970 = vsel %vm969, %v917, %v968
        %vm971 = vcmp.eq.f32.partialorder %v917, 0.0
        %v972 = vand.u32 %v917, 2147483648
        %v973 = vsel %vm971, %v972, %v970
        %v974 = vmax.f32 %v924, 1e-12
        %v975 = vmax.f32 %v931, 1e-12
        %v976 = vmax.f32 %v938, 1e-12
        %v977 = vmax.f32 %v945, 1e-12
        %v978 = vmax.f32 %v952, 1e-12
        %v979 = vmax.f32 %v959, 1e-12
        %v980 = vmax.f32 %v966, 1e-12
        %v981 = vmax.f32 %v973, 1e-12
        %v982 = vrcp.pop %v974
        %v983 = vmul.f32 %v622, %v982
        %v984 = vrcp.pop %v975
        %v985 = vmul.f32 %v627, %v984
        %v986 = vrcp.pop %v976
        %v987 = vmul.f32 %v632, %v986
        %v988 = vrcp.pop %v977
        %v989 = vmul.f32 %v637, %v988
        %v990 = vrcp.pop %v978
        %v991 = vmul.f32 %v642, %v990
        %v992 = vrcp.pop %v979
        %v993 = vmul.f32 %v647, %v992
        %v994 = vrcp.pop %v980
        %v995 = vmul.f32 %v652, %v994
        %v996 = vrcp.pop %v981
        %v997 = vmul.f32 %v657, %v996
        %v998 = vmul.f32 %v731, %v731
        %v999 = vmul.f32 %v736, %v736
        %v1000 = vmul.f32 %v741, %v741
        %v1001 = vmul.f32 %v746, %v746
        %v1002 = vmul.f32 %v751, %v751
        %v1003 = vmul.f32 %v756, %v756
        %v1004 = vmul.f32 %v761, %v761
        %v1005 = vmul.f32 %v766, %v766
        %v1006 = vsel %vm893, %v998, 0.0
        %1007 = vadd.xlane.f32.xlu0 %v1006
        %v1008 = vpop.xlane.xlu0 %1007
        %v1009 = vsel %vm893, %v999, 0.0
        %1010 = vadd.xlane.f32.xlu0 %v1009
        %v1011 = vpop.xlane.xlu0 %1010
        %v1012 = vsel %vm893, %v1000, 0.0
        %1013 = vadd.xlane.f32.xlu0 %v1012
        %v1014 = vpop.xlane.xlu0 %1013
        %v1015 = vsel %vm893, %v1001, 0.0
        %1016 = vadd.xlane.f32.xlu0 %v1015
        %v1017 = vpop.xlane.xlu0 %1016
        %v1018 = vsel %vm893, %v1002, 0.0
        %1019 = vadd.xlane.f32.xlu0 %v1018
        %v1020 = vpop.xlane.xlu0 %1019
        %v1021 = vsel %vm893, %v1003, 0.0
        %1022 = vadd.xlane.f32.xlu0 %v1021
        %v1023 = vpop.xlane.xlu0 %1022
        %v1024 = vsel %vm893, %v1004, 0.0
        %1025 = vadd.xlane.f32.xlu0 %v1024
        %v1026 = vpop.xlane.xlu0 %1025
        %v1027 = vsel %vm893, %v1005, 0.0
        %1028 = vadd.xlane.f32.xlu0 %v1027
        %v1029 = vpop.xlane.xlu0 %1028
        %v1030 = vrsqrt.pop %v1008
        %v1031 = vmul.f32 %v1008, %v1030
        %vm1032 = vcmp.eq.f32.partialorder %v1008, inf
        %v1033 = vsel %vm1032, %v1008, %v1031
        %vm1034 = vcmp.eq.f32.partialorder %v1008, 0.0
        %v1035 = vand.u32 %v1008, 2147483648
        %v1036 = vsel %vm1034, %v1035, %v1033
        %v1037 = vrsqrt.pop %v1011
        %v1038 = vmul.f32 %v1011, %v1037
        %vm1039 = vcmp.eq.f32.partialorder %v1011, inf
        %v1040 = vsel %vm1039, %v1011, %v1038
        %vm1041 = vcmp.eq.f32.partialorder %v1011, 0.0
        %v1042 = vand.u32 %v1011, 2147483648
        %v1043 = vsel %vm1041, %v1042, %v1040
        %v1044 = vrsqrt.pop %v1014
        %v1045 = vmul.f32 %v1014, %v1044
        %vm1046 = vcmp.eq.f32.partialorder %v1014, inf
        %v1047 = vsel %vm1046, %v1014, %v1045
        %vm1048 = vcmp.eq.f32.partialorder %v1014, 0.0
        %v1049 = vand.u32 %v1014, 2147483648
        %v1050 = vsel %vm1048, %v1049, %v1047
        %v1051 = vrsqrt.pop %v1017
        %v1052 = vmul.f32 %v1017, %v1051
        %vm1053 = vcmp.eq.f32.partialorder %v1017, inf
        %v1054 = vsel %vm1053, %v1017, %v1052
        %vm1055 = vcmp.eq.f32.partialorder %v1017, 0.0
        %v1056 = vand.u32 %v1017, 2147483648
        %v1057 = vsel %vm1055, %v1056, %v1054
        %v1058 = vrsqrt.pop %v1020
        %v1059 = vmul.f32 %v1020, %v1058
        %vm1060 = vcmp.eq.f32.partialorder %v1020, inf
        %v1061 = vsel %vm1060, %v1020, %v1059
        %vm1062 = vcmp.eq.f32.partialorder %v1020, 0.0
        %v1063 = vand.u32 %v1020, 2147483648
        %v1064 = vsel %vm1062, %v1063, %v1061
        %v1065 = vrsqrt.pop %v1023
        %v1066 = vmul.f32 %v1023, %v1065
        %vm1067 = vcmp.eq.f32.partialorder %v1023, inf
        %v1068 = vsel %vm1067, %v1023, %v1066
        %vm1069 = vcmp.eq.f32.partialorder %v1023, 0.0
        %v1070 = vand.u32 %v1023, 2147483648
        %v1071 = vsel %vm1069, %v1070, %v1068
        %v1072 = vrsqrt.pop %v1026
        %v1073 = vmul.f32 %v1026, %v1072
        %vm1074 = vcmp.eq.f32.partialorder %v1026, inf
        %v1075 = vsel %vm1074, %v1026, %v1073
        %vm1076 = vcmp.eq.f32.partialorder %v1026, 0.0
        %v1077 = vand.u32 %v1026, 2147483648
        %v1078 = vsel %vm1076, %v1077, %v1075
        %v1079 = vrsqrt.pop %v1029
        %v1080 = vmul.f32 %v1029, %v1079
        %vm1081 = vcmp.eq.f32.partialorder %v1029, inf
        %v1082 = vsel %vm1081, %v1029, %v1080
        %vm1083 = vcmp.eq.f32.partialorder %v1029, 0.0
        %v1084 = vand.u32 %v1029, 2147483648
        %v1085 = vsel %vm1083, %v1084, %v1082
        %v1086 = vmax.f32 %v1036, 1e-12
        %v1087 = vmax.f32 %v1043, 1e-12
        %v1088 = vmax.f32 %v1050, 1e-12
        %v1089 = vmax.f32 %v1057, 1e-12
        %v1090 = vmax.f32 %v1064, 1e-12
        %v1091 = vmax.f32 %v1071, 1e-12
        %v1092 = vmax.f32 %v1078, 1e-12
        %v1093 = vmax.f32 %v1085, 1e-12
        %v1094 = vrcp.pop %v1086
        %v1095 = vmul.f32 %v731, %v1094
        %v1096 = vrcp.pop %v1087
        %v1097 = vmul.f32 %v736, %v1096
        %v1098 = vrcp.pop %v1088
        %v1099 = vmul.f32 %v741, %v1098
        %v1100 = vrcp.pop %v1089
        %v1101 = vmul.f32 %v746, %v1100
        %v1102 = vrcp.pop %v1090
        %v1103 = vmul.f32 %v751, %v1102
        %v1104 = vrcp.pop %v1091
        %v1105 = vmul.f32 %v756, %v1104
        %v1106 = vrcp.pop %v1092
        %v1107 = vmul.f32 %v761, %v1106
        %v1108 = vrcp.pop %v1093
        %v1109 = vmul.f32 %v766, %v1108
        %v1111 = vsel %vm893, %v983, 0
        %v1114 = vsel %vm893, %v985, 0
        %v1117 = vsel %vm893, %v987, 0
        %v1120 = vsel %vm893, %v989, 0
        %v1123 = vsel %vm893, %v991, 0
        %v1126 = vsel %vm893, %v993, 0
        %v1129 = vsel %vm893, %v995, 0
        %v1132 = vsel %vm893, %v997, 0
        %v1135 = vsel %vm893, %v1095, 0
        %v1138 = vsel %vm893, %v1097, 0
        %v1141 = vsel %vm893, %v1099, 0
        %v1144 = vsel %vm893, %v1101, 0
        %v1147 = vsel %vm893, %v1103, 0
        %v1150 = vsel %vm893, %v1105, 0
        %v1153 = vsel %vm893, %v1107, 0
        %v1156 = vsel %vm893, %v1109, 0
        %1158 = vmatprep.subr.mxu0 0.0
        %1159 = vmatpush1.xpose.msra.mxu0 %v1135
        %1160 = vmatprep.subr.mxu0 0.0
        %1161 = vmatpush1.xpose.msra.mxu0 %v1138
        %1162 = vmatprep.subr.mxu0 0.0
        %1163 = vmatpush1.xpose.msra.mxu0 %v1141
        %1164 = vmatprep.subr.mxu0 0.0
        %1165 = vmatpush1.xpose.msra.mxu0 %v1144
        %1166 = vmatprep.subr.mxu0 0.0
        %1167 = vmatpush1.xpose.msra.mxu0 %v1147
        %1168 = vmatprep.subr.mxu0 0.0
        %1169 = vmatpush1.xpose.msra.mxu0 %v1150
        %1170 = vmatprep.subr.mxu0 0.0
        %1171 = vmatpush1.xpose.msra.mxu0 %v1153
        %1172 = vmatprep.subr.mxu0 0.0
        %1173 = vmatpush1.xpose.msra.mxu0 %v1156
        %1174 = vmatprep.subr.mxu0 0.0
        %1175 = vmatpush1.xpose.msra.mxu0 0.0
        %1176 = vmatprep.subr.mxu0 0.0
        %1177 = vmatpush1.xpose.msra.mxu0 0.0
        %1178 = vmatprep.subr.mxu0 0.0
        %1179 = vmatpush1.xpose.msra.mxu0 0.0
        %1180 = vmatprep.subr.mxu0 0.0
        %1181 = vmatpush1.xpose.msra.mxu0 0.0
        %1182 = vmatprep.subr.mxu0 0.0
        %1183 = vmatpush1.xpose.msra.mxu0 0.0
        %1184 = vmatprep.subr.mxu0 0.0
        %1185 = vmatpush1.xpose.msra.mxu0 0.0
        %1186 = vmatprep.subr.mxu0 0.0
        %1187 = vmatpush1.xpose.msra.mxu0 0.0
        %1188 = vmatprep.subr.mxu0 0.0
        %1189 = vmatpush1.xpose.msra.mxu0 0.0
        %1190 = vmatprep.subr.mxu0 0.0
        %1191 = vmatpush1.xpose.msra.mxu0 0.0
        %1192 = vmatprep.subr.mxu0 0.0
        %1193 = vmatpush1.xpose.msra.mxu0 0.0
        %1194 = vmatprep.subr.mxu0 0.0
        %1195 = vmatpush1.xpose.msra.mxu0 0.0
        %1196 = vmatprep.subr.mxu0 0.0
        %1197 = vmatpush1.xpose.msra.mxu0 0.0
        %1198 = vmatprep.subr.mxu0 0.0
        %1199 = vmatpush1.xpose.msra.mxu0 0.0
        %1200 = vmatprep.subr.mxu0 0.0
        %1201 = vmatpush1.xpose.msra.mxu0 0.0
        %1202 = vmatprep.subr.mxu0 0.0
        %1203 = vmatpush1.xpose.msra.mxu0 0.0
        %1204 = vmatprep.subr.mxu0 0.0
        %1205 = vmatpush1.xpose.msra.mxu0 0.0
        %1206 = vmatprep.subr.mxu0 0.0
        %1207 = vmatpush1.xpose.msra.mxu0 0.0
        %1208 = vmatprep.subr.mxu0 0.0
        %1209 = vmatpush1.xpose.msra.mxu0 0.0
        %1210 = vmatprep.subr.mxu0 0.0
        %1211 = vmatpush1.xpose.msra.mxu0 0.0
        %1212 = vmatprep.subr.mxu0 0.0
        %1213 = vmatpush1.xpose.msra.mxu0 0.0
        %1214 = vmatprep.subr.mxu0 0.0
        %1215 = vmatpush1.xpose.msra.mxu0 0.0
        %1216 = vmatprep.subr.mxu0 0.0
        %1217 = vmatpush1.xpose.msra.mxu0 0.0
        %1218 = vmatprep.subr.mxu0 0.0
        %1219 = vmatpush1.xpose.msra.mxu0 0.0
        %1220 = vmatprep.subr.mxu0 0.0
        %1221 = vmatpush1.xpose.msra.mxu0 0.0
        %1222 = vmatprep.mubr.f32.mxu0 0.0
        %1223 = vmatmul.mubr.f32.gmra.mrb[0].mxu0 %v1111
        %v1224 = vpop.f32.mrb[0].mxu0
        %v1225 = vadd.f32 0.0, %v1224
        %v1226 = vpop.f32.mrb[0].mxu0
        %1227 = vmatprep.mubr.f32.mxu0 0.0
        %1228 = vmatmul.mubr.f32.gmra.mrb[0].mxu0 %v1114
        %v1229 = vpop.f32.mrb[0].mxu0
        %v1230 = vadd.f32 0.0, %v1229
        %v1231 = vpop.f32.mrb[0].mxu0
        %1232 = vmatprep.mubr.f32.mxu0 0.0
        %1233 = vmatmul.mubr.f32.gmra.mrb[0].mxu0 %v1117
        %v1234 = vpop.f32.mrb[0].mxu0
        %v1235 = vadd.f32 0.0, %v1234
        %v1236 = vpop.f32.mrb[0].mxu0
        %1237 = vmatprep.mubr.f32.mxu0 0.0
        %1238 = vmatmul.mubr.f32.gmra.mrb[0].mxu0 %v1120
        %v1239 = vpop.f32.mrb[0].mxu0
        %v1240 = vadd.f32 0.0, %v1239
        %v1241 = vpop.f32.mrb[0].mxu0
        %1242 = vmatprep.mubr.f32.mxu0 0.0
        %1243 = vmatmul.mubr.f32.gmra.mrb[0].mxu0 %v1123
        %v1244 = vpop.f32.mrb[0].mxu0
        %v1245 = vadd.f32 0.0, %v1244
        %v1246 = vpop.f32.mrb[0].mxu0
        %1247 = vmatprep.mubr.f32.mxu0 0.0
        %1248 = vmatmul.mubr.f32.gmra.mrb[0].mxu0 %v1126
        %v1249 = vpop.f32.mrb[0].mxu0
        %v1250 = vadd.f32 0.0, %v1249
        %v1251 = vpop.f32.mrb[0].mxu0
        %1252 = vmatprep.mubr.f32.mxu0 0.0
        %1253 = vmatmul.mubr.f32.gmra.mrb[0].mxu0 %v1129
        %v1254 = vpop.f32.mrb[0].mxu0
        %v1255 = vadd.f32 0.0, %v1254
        %v1256 = vpop.f32.mrb[0].mxu0
        %1257 = vmatprep.mubr.f32.mxu0 0.0
        %1258 = vmatmul.mubr.f32.gmra.mrb[0].mxu0 %v1132
        %v1259 = vpop.f32.mrb[0].mxu0
        %v1260 = vadd.f32 0.0, %v1259
        %v1261 = vpop.f32.mrb[0].mxu0
        %1262 = vdwg.mxu0
        %s1263 = sld [smem:[#allocation2 + %s27]]
        %v1264 = vstv %s1263
        %v1265 = vmul.f32 %v1225, %v1264
        %v1266 = vmul.f32 %v1230, %v1264
        %v1267 = vmul.f32 %v1235, %v1264
        %v1268 = vmul.f32 %v1240, %v1264
        %v1269 = vmul.f32 %v1245, %v1264
        %v1270 = vmul.f32 %v1250, %v1264
        %v1271 = vmul.f32 %v1255, %v1264
        %v1272 = vmul.f32 %v1260, %v1264
        %v1273 = vld [vmem:[%s501] sm:$0xff]
        %v1274 = vld [vmem:[%s501 + $0x8] sm:$0xff]
        %v1275 = vld [vmem:[%s501 + $0x10] sm:$0xff]
        %v1276 = vld [vmem:[%s501 + $0x18] sm:$0xff]
        %v1277 = vld [vmem:[%s501 + $0x20] sm:$0xff]
        %v1278 = vld [vmem:[%s501 + $0x28] sm:$0xff]
        %v1279 = vld [vmem:[%s501 + $0x30] sm:$0xff]
        %v1280 = vld [vmem:[%s501 + $0x38] sm:$0xff]
        %v1281 = vadd.f32 %v1265, %v1273
        %v1282 = vadd.f32 %v1266, %v1274
        %v1283 = vadd.f32 %v1267, %v1275
        %v1284 = vadd.f32 %v1268, %v1276
        %v1285 = vadd.f32 %v1269, %v1277
        %v1286 = vadd.f32 %v1270, %v1278
        %v1287 = vadd.f32 %v1271, %v1279
        %v1288 = vadd.f32 %v1272, %v1280
        %vm1289 = vcmask 523264
        %v1290 = vsel %vm1289, %v1281, -inf
        %1291 = vmax.xlane.f32.xlu0 %v1290
        %v1292 = vpop.xlane.xlu0 %1291
        %v1293 = vsel %vm1289, %v1282, -inf
        %1294 = vmax.xlane.f32.xlu0 %v1293
        %v1295 = vpop.xlane.xlu0 %1294
        %v1296 = vsel %vm1289, %v1283, -inf
        %1297 = vmax.xlane.f32.xlu0 %v1296
        %v1298 = vpop.xlane.xlu0 %1297
        %v1299 = vsel %vm1289, %v1284, -inf
        %1300 = vmax.xlane.f32.xlu0 %v1299
        %v1301 = vpop.xlane.xlu0 %1300
        %v1302 = vsel %vm1289, %v1285, -inf
        %1303 = vmax.xlane.f32.xlu0 %v1302
        %v1304 = vpop.xlane.xlu0 %1303
        %v1305 = vsel %vm1289, %v1286, -inf
        %1306 = vmax.xlane.f32.xlu0 %v1305
        %v1307 = vpop.xlane.xlu0 %1306
        %v1308 = vsel %vm1289, %v1287, -inf
        %1309 = vmax.xlane.f32.xlu0 %v1308
        %v1310 = vpop.xlane.xlu0 %1309
        %v1311 = vsel %vm1289, %v1288, -inf
        %1312 = vmax.xlane.f32.xlu0 %v1311
        %v1313 = vpop.xlane.xlu0 %1312
        %v1314 = vsub.f32 %v1281, %v1292
        %v1315 = vsub.f32 %v1282, %v1295
        %v1316 = vsub.f32 %v1283, %v1298
        %v1317 = vsub.f32 %v1284, %v1301
        %v1318 = vsub.f32 %v1285, %v1304
        %v1319 = vsub.f32 %v1286, %v1307
        %v1320 = vsub.f32 %v1287, %v1310
        %v1321 = vsub.f32 %v1288, %v1313
        %v1322 = vmul.f32 %v1314, 1.442695
        %v1323 = vpow.pop %v1322
        %v1324 = vmul.f32 %v1315, 1.442695
        %v1325 = vpow.pop %v1324
        %v1326 = vmul.f32 %v1316, 1.442695
        %v1327 = vpow.pop %v1326
        %v1328 = vmul.f32 %v1317, 1.442695
        %v1329 = vpow.pop %v1328
        %v1330 = vmul.f32 %v1318, 1.442695
        %v1331 = vpow.pop %v1330
        %v1332 = vmul.f32 %v1319, 1.442695
        %v1333 = vpow.pop %v1332
        %v1334 = vmul.f32 %v1320, 1.442695
        %v1335 = vpow.pop %v1334
        %v1336 = vmul.f32 %v1321, 1.442695
        %v1337 = vpow.pop %v1336
        %v1338 = vsel %vm1289, %v1323, 0.0
        %1339 = vadd.xlane.f32.xlu0 %v1338
        %v1340 = vpop.xlane.xlu0 %1339
        %v1341 = vsel %vm1289, %v1325, 0.0
        %1342 = vadd.xlane.f32.xlu0 %v1341
        %v1343 = vpop.xlane.xlu0 %1342
        %v1344 = vsel %vm1289, %v1327, 0.0
        %1345 = vadd.xlane.f32.xlu0 %v1344
        %v1346 = vpop.xlane.xlu0 %1345
        %v1347 = vsel %vm1289, %v1329, 0.0
        %1348 = vadd.xlane.f32.xlu0 %v1347
        %v1349 = vpop.xlane.xlu0 %1348
        %v1350 = vsel %vm1289, %v1331, 0.0
        %1351 = vadd.xlane.f32.xlu0 %v1350
        %v1352 = vpop.xlane.xlu0 %1351
        %v1353 = vsel %vm1289, %v1333, 0.0
        %1354 = vadd.xlane.f32.xlu0 %v1353
        %v1355 = vpop.xlane.xlu0 %1354
        %v1356 = vsel %vm1289, %v1335, 0.0
        %1357 = vadd.xlane.f32.xlu0 %v1356
        %v1358 = vpop.xlane.xlu0 %1357
        %v1359 = vsel %vm1289, %v1337, 0.0
        %1360 = vadd.xlane.f32.xlu0 %v1359
        %v1361 = vpop.xlane.xlu0 %1360
        %v1362 = vrcp.pop %v1340
        %v1363 = vmul.f32 %v1323, %v1362
        %v1364 = vrcp.pop %v1343
        %v1365 = vmul.f32 %v1325, %v1364
        %v1366 = vrcp.pop %v1346
        %v1367 = vmul.f32 %v1327, %v1366
        %v1368 = vrcp.pop %v1349
        %v1369 = vmul.f32 %v1329, %v1368
        %v1370 = vrcp.pop %v1352
        %v1371 = vmul.f32 %v1331, %v1370
        %v1372 = vrcp.pop %v1355
        %v1373 = vmul.f32 %v1333, %v1372
        %v1374 = vrcp.pop %v1358
        %v1375 = vmul.f32 %v1335, %v1374
        %v1376 = vrcp.pop %v1361
        %v1377 = vmul.f32 %v1337, %v1376
        %v1379 = vsel %vm1289, %v1363, 0
        %v1382 = vsel %vm1289, %v1365, 0
        %v1385 = vsel %vm1289, %v1367, 0
        %v1388 = vsel %vm1289, %v1369, 0
        %v1391 = vsel %vm1289, %v1371, 0
        %v1394 = vsel %vm1289, %v1373, 0
        %v1397 = vsel %vm1289, %v1375, 0
        %v1400 = vsel %vm1289, %v1377, 0
        %1402 = vmatprep.subr.mxu0 0.0
        %1403 = vmatpush1.msra.mxu0 %v847
        %1404 = vmatprep.subr.mxu0 0.0
        %1405 = vmatpush1.msra.mxu0 %v852
        %1406 = vmatprep.subr.mxu0 0.0
        %1407 = vmatpush1.msra.mxu0 %v857
        %1408 = vmatprep.subr.mxu0 0.0
        %1409 = vmatpush1.msra.mxu0 %v862
        %1410 = vmatprep.subr.mxu0 0.0
        %1411 = vmatpush1.msra.mxu0 %v867
        %1412 = vmatprep.subr.mxu0 0.0
        %1413 = vmatpush1.msra.mxu0 %v872
        %1414 = vmatprep.subr.mxu0 0.0
        %1415 = vmatpush1.msra.mxu0 %v877
        %1416 = vmatprep.subr.mxu0 0.0
        %1417 = vmatpush1.msra.mxu0 %v882
        %1418 = vmatprep.subr.mxu0 0.0
        %1419 = vmatpush1.msra.mxu0 0.0
        %1420 = vmatprep.subr.mxu0 0.0
        %1421 = vmatpush1.msra.mxu0 0.0
        %1422 = vmatprep.subr.mxu0 0.0
        %1423 = vmatpush1.msra.mxu0 0.0
        %1424 = vmatprep.subr.mxu0 0.0
        %1425 = vmatpush1.msra.mxu0 0.0
        %1426 = vmatprep.subr.mxu0 0.0
        %1427 = vmatpush1.msra.mxu0 0.0
        %1428 = vmatprep.subr.mxu0 0.0
        %1429 = vmatpush1.msra.mxu0 0.0
        %1430 = vmatprep.subr.mxu0 0.0
        %1431 = vmatpush1.msra.mxu0 0.0
        %1432 = vmatprep.subr.mxu0 0.0
        %1433 = vmatpush1.msra.mxu0 0.0
        %1434 = vmatprep.subr.mxu0 0.0
        %1435 = vmatpush1.msra.mxu0 0.0
        %1436 = vmatprep.subr.mxu0 0.0
        %1437 = vmatpush1.msra.mxu0 0.0
        %1438 = vmatprep.subr.mxu0 0.0
        %1439 = vmatpush1.msra.mxu0 0.0
        %1440 = vmatprep.subr.mxu0 0.0
        %1441 = vmatpush1.msra.mxu0 0.0
        %1442 = vmatprep.subr.mxu0 0.0
        %1443 = vmatpush1.msra.mxu0 0.0
        %1444 = vmatprep.subr.mxu0 0.0
        %1445 = vmatpush1.msra.mxu0 0.0
        %1446 = vmatprep.subr.mxu0 0.0
        %1447 = vmatpush1.msra.mxu0 0.0
        %1448 = vmatprep.subr.mxu0 0.0
        %1449 = vmatpush1.msra.mxu0 0.0
        %1450 = vmatprep.subr.mxu0 0.0
        %1451 = vmatpush1.msra.mxu0 0.0
        %1452 = vmatprep.subr.mxu0 0.0
        %1453 = vmatpush1.msra.mxu0 0.0
        %1454 = vmatprep.subr.mxu0 0.0
        %1455 = vmatpush1.msra.mxu0 0.0
        %1456 = vmatprep.subr.mxu0 0.0
        %1457 = vmatpush1.msra.mxu0 0.0
        %1458 = vmatprep.subr.mxu0 0.0
        %1459 = vmatpush1.msra.mxu0 0.0
        %1460 = vmatprep.subr.mxu0 0.0
        %1461 = vmatpush1.msra.mxu0 0.0
        %1462 = vmatprep.subr.mxu0 0.0
        %1463 = vmatpush1.msra.mxu0 0.0
        %1464 = vmatprep.subr.mxu0 0.0
        %1465 = vmatpush1.msra.mxu0 0.0
        %1466 = vmatprep.mubr.f32.mxu0 0.0
        %1467 = vmatmul.mubr.f32.gmra.mrb[0].mxu0 %v1379
        %v1468 = vpop.f32.mrb[0].mxu0
        %v1469 = vadd.f32 0.0, %v1468
        %v1470 = vpop.f32.mrb[0].mxu0
        %1471 = vmatprep.mubr.f32.mxu0 0.0
        %1472 = vmatmul.mubr.f32.gmra.mrb[0].mxu0 %v1382
        %v1473 = vpop.f32.mrb[0].mxu0
        %v1474 = vadd.f32 0.0, %v1473
        %v1475 = vpop.f32.mrb[0].mxu0
        %1476 = vmatprep.mubr.f32.mxu0 0.0
        %1477 = vmatmul.mubr.f32.gmra.mrb[0].mxu0 %v1385
        %v1478 = vpop.f32.mrb[0].mxu0
        %v1479 = vadd.f32 0.0, %v1478
        %v1480 = vpop.f32.mrb[0].mxu0
        %1481 = vmatprep.mubr.f32.mxu0 0.0
        %1482 = vmatmul.mubr.f32.gmra.mrb[0].mxu0 %v1388
        %v1483 = vpop.f32.mrb[0].mxu0
        %v1484 = vadd.f32 0.0, %v1483
        %v1485 = vpop.f32.mrb[0].mxu0
        %1486 = vmatprep.mubr.f32.mxu0 0.0
        %1487 = vmatmul.mubr.f32.gmra.mrb[0].mxu0 %v1391
        %v1488 = vpop.f32.mrb[0].mxu0
        %v1489 = vadd.f32 0.0, %v1488
        %v1490 = vpop.f32.mrb[0].mxu0
        %1491 = vmatprep.mubr.f32.mxu0 0.0
        %1492 = vmatmul.mubr.f32.gmra.mrb[0].mxu0 %v1394
        %v1493 = vpop.f32.mrb[0].mxu0
        %v1494 = vadd.f32 0.0, %v1493
        %v1495 = vpop.f32.mrb[0].mxu0
        %1496 = vmatprep.mubr.f32.mxu0 0.0
        %1497 = vmatmul.mubr.f32.gmra.mrb[0].mxu0 %v1397
        %v1498 = vpop.f32.mrb[0].mxu0
        %v1499 = vadd.f32 0.0, %v1498
        %v1500 = vpop.f32.mrb[0].mxu0
        %1501 = vmatprep.mubr.f32.mxu0 0.0
        %1502 = vmatmul.mubr.f32.gmra.mrb[0].mxu0 %v1400
        %v1503 = vpop.f32.mrb[0].mxu0
        %v1504 = vadd.f32 0.0, %v1503
        %v1505 = vpop.f32.mrb[0].mxu0
        %1506 = vdwg.mxu0
        %v1507 = vld [vmem:[%s505] sm:$0xff]
        %v1509 = vsel %vm893, %v1469, 0
        %v1512 = vsel %vm893, %v1474, 0
        %v1515 = vsel %vm893, %v1479, 0
        %v1518 = vsel %vm893, %v1484, 0
        %v1521 = vsel %vm893, %v1489, 0
        %v1524 = vsel %vm893, %v1494, 0
        %v1527 = vsel %vm893, %v1499, 0
        %v1530 = vsel %vm893, %v1504, 0
        %1532 = vmatprep.subr.mxu0 0.0
        %1533 = vmatpush1.msra.mxu0 %v1507
        %1534 = vmatprep.subr.mxu0 0.0
        %1535 = vmatpush1.msra.mxu0 0.0
        %1536 = vmatprep.subr.mxu0 0.0
        %1537 = vmatpush1.msra.mxu0 0.0
        %1538 = vmatprep.subr.mxu0 0.0
        %1539 = vmatpush1.msra.mxu0 0.0
        %1540 = vmatprep.subr.mxu0 0.0
        %1541 = vmatpush1.msra.mxu0 0.0
        %1542 = vmatprep.subr.mxu0 0.0
        %1543 = vmatpush1.msra.mxu0 0.0
        %1544 = vmatprep.subr.mxu0 0.0
        %1545 = vmatpush1.msra.mxu0 0.0
        %1546 = vmatprep.subr.mxu0 0.0
        %1547 = vmatpush1.msra.mxu0 0.0
        %1548 = vmatprep.subr.mxu0 0.0
        %1549 = vmatpush1.msra.mxu0 0.0
        %1550 = vmatprep.subr.mxu0 0.0
        %1551 = vmatpush1.msra.mxu0 0.0
        %1552 = vmatprep.subr.mxu0 0.0
        %1553 = vmatpush1.msra.mxu0 0.0
        %1554 = vmatprep.subr.mxu0 0.0
        %1555 = vmatpush1.msra.mxu0 0.0
        %1556 = vmatprep.subr.mxu0 0.0
        %1557 = vmatpush1.msra.mxu0 0.0
        %1558 = vmatprep.subr.mxu0 0.0
        %1559 = vmatpush1.msra.mxu0 0.0
        %1560 = vmatprep.subr.mxu0 0.0
        %1561 = vmatpush1.msra.mxu0 0.0
        %1562 = vmatprep.subr.mxu0 0.0
        %1563 = vmatpush1.msra.mxu0 0.0
        %1564 = vmatprep.subr.mxu0 0.0
        %1565 = vmatpush1.msra.mxu0 0.0
        %1566 = vmatprep.subr.mxu0 0.0
        %1567 = vmatpush1.msra.mxu0 0.0
        %1568 = vmatprep.subr.mxu0 0.0
        %1569 = vmatpush1.msra.mxu0 0.0
        %1570 = vmatprep.subr.mxu0 0.0
        %1571 = vmatpush1.msra.mxu0 0.0
        %1572 = vmatprep.subr.mxu0 0.0
        %1573 = vmatpush1.msra.mxu0 0.0
        %1574 = vmatprep.subr.mxu0 0.0
        %1575 = vmatpush1.msra.mxu0 0.0
        %1576 = vmatprep.subr.mxu0 0.0
        %1577 = vmatpush1.msra.mxu0 0.0
        %1578 = vmatprep.subr.mxu0 0.0
        %1579 = vmatpush1.msra.mxu0 0.0
        %1580 = vmatprep.subr.mxu0 0.0
        %1581 = vmatpush1.msra.mxu0 0.0
        %1582 = vmatprep.subr.mxu0 0.0
        %1583 = vmatpush1.msra.mxu0 0.0
        %1584 = vmatprep.subr.mxu0 0.0
        %1585 = vmatpush1.msra.mxu0 0.0
        %1586 = vmatprep.subr.mxu0 0.0
        %1587 = vmatpush1.msra.mxu0 0.0
        %1588 = vmatprep.subr.mxu0 0.0
        %1589 = vmatpush1.msra.mxu0 0.0
        %1590 = vmatprep.subr.mxu0 0.0
        %1591 = vmatpush1.msra.mxu0 0.0
        %1592 = vmatprep.subr.mxu0 0.0
        %1593 = vmatpush1.msra.mxu0 0.0
        %1594 = vmatprep.subr.mxu0 0.0
        %1595 = vmatpush1.msra.mxu0 0.0
        %1596 = vmatprep.mubr.f32.mxu0 0.0
        %1597 = vmatmul.mubr.f32.gmra.mrb[0].mxu0 %v1509
        %v1598 = vpop.f32.mrb[0].mxu0
        %v1599 = vadd.f32 0.0, %v1598
        %v1600 = vpop.f32.mrb[0].mxu0
        %1601 = vmatprep.mubr.f32.mxu0 0.0
        %1602 = vmatmul.mubr.f32.gmra.mrb[0].mxu0 %v1512
        %v1603 = vpop.f32.mrb[0].mxu0
        %v1604 = vadd.f32 0.0, %v1603
        %v1605 = vpop.f32.mrb[0].mxu0
        %1606 = vmatprep.mubr.f32.mxu0 0.0
        %1607 = vmatmul.mubr.f32.gmra.mrb[0].mxu0 %v1515
        %v1608 = vpop.f32.mrb[0].mxu0
        %v1609 = vadd.f32 0.0, %v1608
        %v1610 = vpop.f32.mrb[0].mxu0
        %1611 = vmatprep.mubr.f32.mxu0 0.0
        %1612 = vmatmul.mubr.f32.gmra.mrb[0].mxu0 %v1518
        %v1613 = vpop.f32.mrb[0].mxu0
        %v1614 = vadd.f32 0.0, %v1613
        %v1615 = vpop.f32.mrb[0].mxu0
        %1616 = vmatprep.mubr.f32.mxu0 0.0
        %1617 = vmatmul.mubr.f32.gmra.mrb[0].mxu0 %v1521
        %v1618 = vpop.f32.mrb[0].mxu0
        %v1619 = vadd.f32 0.0, %v1618
        %v1620 = vpop.f32.mrb[0].mxu0
        %1621 = vmatprep.mubr.f32.mxu0 0.0
        %1622 = vmatmul.mubr.f32.gmra.mrb[0].mxu0 %v1524
        %v1623 = vpop.f32.mrb[0].mxu0
        %v1624 = vadd.f32 0.0, %v1623
        %v1625 = vpop.f32.mrb[0].mxu0
        %1626 = vmatprep.mubr.f32.mxu0 0.0
        %1627 = vmatmul.mubr.f32.gmra.mrb[0].mxu0 %v1527
        %v1628 = vpop.f32.mrb[0].mxu0
        %v1629 = vadd.f32 0.0, %v1628
        %v1630 = vpop.f32.mrb[0].mxu0
        %1631 = vmatprep.mubr.f32.mxu0 0.0
        %1632 = vmatmul.mubr.f32.gmra.mrb[0].mxu0 %v1530
        %v1633 = vpop.f32.mrb[0].mxu0
        %v1634 = vadd.f32 0.0, %v1633
        %v1635 = vpop.f32.mrb[0].mxu0
        %1636 = vdwg.mxu0
        %p1637 = scmp.eq.s32.totalorder %s27, 0
        // Predicated region
        $region65: #{tpu_custom_call.1} parent=59 // pred_check
          %p1638 = pneg %p1637
        $region66: #{tpu_custom_call.1} parent=59 // pred_check_branch
          %1640 = sbr.rel (%p1638) target = $region68
        $region67: #{tpu_custom_call.1} parent=59 // pred_region
          %v1641 = vld [vmem:[%s9] sm:$0x1]
          %v1643 = vlaneseq
          %v1644 = vshrl.u32 %v1643, 7
          %v1645 = vsub.s32 0, %v1644
          %v1646 = vrot.slane %v1641, %v1645
          %v1648 = vadd.f32 %v1646, %v1599
          %v1649 = vadd.f32 %v1646, %v1604
          %v1650 = vadd.f32 %v1646, %v1609
          %v1651 = vadd.f32 %v1646, %v1614
          %v1652 = vadd.f32 %v1646, %v1619
          %v1653 = vadd.f32 %v1646, %v1624
          %v1654 = vadd.f32 %v1646, %v1629
          %v1655 = vadd.f32 %v1646, %v1634
          %1656 = vst.msk [vmem:[%s510] sm:$0xff] %vm530, %v1648
          %1657 = vst.msk [vmem:[%s510 + $0x8] sm:$0xff] %vm530, %v1649
          %1658 = vst.msk [vmem:[%s510 + $0x10] sm:$0xff] %vm530, %v1650
          %1659 = vst.msk [vmem:[%s510 + $0x18] sm:$0xff] %vm530, %v1651
          %1660 = vst.msk [vmem:[%s510 + $0x20] sm:$0xff] %vm530, %v1652
          %1661 = vst.msk [vmem:[%s510 + $0x28] sm:$0xff] %vm530, %v1653
          %1662 = vst.msk [vmem:[%s510 + $0x30] sm:$0xff] %vm530, %v1654
          %1663 = vst.msk [vmem:[%s510 + $0x38] sm:$0xff] %vm530, %v1655
        $region68: #{tpu_custom_call.1} parent=59 // pred_fallthru
          _
        %p1664 = scmp.ne.s32.totalorder %s27, 0
        // Predicated region
        $region69: #{tpu_custom_call.1} parent=59 // pred_check
          %p1665 = pneg %p1664
        $region70: #{tpu_custom_call.1} parent=59 // pred_check_branch
          %1667 = sbr.rel (%p1665) target = $region72
        $region71: #{tpu_custom_call.1} parent=59 // pred_region
          %v1668 = vld [vmem:[%s510] sm:$0xff]
          %v1669 = vld [vmem:[%s510 + $0x8] sm:$0xff]
          %v1670 = vld [vmem:[%s510 + $0x10] sm:$0xff]
          %v1671 = vld [vmem:[%s510 + $0x18] sm:$0xff]
          %v1672 = vld [vmem:[%s510 + $0x20] sm:$0xff]
          %v1673 = vld [vmem:[%s510 + $0x28] sm:$0xff]
          %v1674 = vld [vmem:[%s510 + $0x30] sm:$0xff]
          %v1675 = vld [vmem:[%s510 + $0x38] sm:$0xff]
          %v1676 = vadd.f32 %v1668, %v1599
          %v1677 = vadd.f32 %v1669, %v1604
          %v1678 = vadd.f32 %v1670, %v1609
          %v1679 = vadd.f32 %v1671, %v1614
          %v1680 = vadd.f32 %v1672, %v1619
          %v1681 = vadd.f32 %v1673, %v1624
          %v1682 = vadd.f32 %v1674, %v1629
          %v1683 = vadd.f32 %v1675, %v1634
          %1684 = vst.msk [vmem:[%s510] sm:$0xff] %vm530, %v1676
          %1685 = vst.msk [vmem:[%s510 + $0x8] sm:$0xff] %vm530, %v1677
          %1686 = vst.msk [vmem:[%s510 + $0x10] sm:$0xff] %vm530, %v1678
          %1687 = vst.msk [vmem:[%s510 + $0x18] sm:$0xff] %vm530, %v1679
          %1688 = vst.msk [vmem:[%s510 + $0x20] sm:$0xff] %vm530, %v1680
          %1689 = vst.msk [vmem:[%s510 + $0x28] sm:$0xff] %vm530, %v1681
          %1690 = vst.msk [vmem:[%s510 + $0x30] sm:$0xff] %vm530, %v1682
          %1691 = vst.msk [vmem:[%s510 + $0x38] sm:$0xff] %vm530, %v1683
        $region72: #{tpu_custom_call.1} parent=59 // pred_fallthru
          _
        %p1692 = scmp.lt.s32.totalorder %s26, 1
        %s1693 = scalar_select %p1692, %s26, 1
        %s1694 = smul.addr %s1693, 8
        %s1695 = smul.addr %s1694, 8
        %s1696 = scalar_lea.vmem %s10, %s1695
        // Predicated region
        $region73: #{tpu_custom_call.1} parent=59 // pred_check
          %p1697 = pneg %p302
        $region74: #{tpu_custom_call.1} parent=59 // pred_check_branch
          %1699 = sbr.rel (%p1697) target = $region76
        $region75: #{tpu_custom_call.1} parent=59 // pred_region
          _
        $region76: #{tpu_custom_call.1} parent=59 // pred_fallthru
          _
      $region60: #{tpu_custom_call.1} parent=5 // pred_fallthru
        _
      %p1700 = scmp.le.s32.totalorder 2, %s17
      // Predicated region
      $region77: #{tpu_custom_call.1} parent=5 // pred_check
        %p1701 = pneg %p1700
      $region78: #{tpu_custom_call.1} parent=5 // pred_check_branch
        %1703 = sbr.rel (%p1701) target = $region80
      $region79: #{tpu_custom_call.1} parent=5 // pred_region
        %s1704 = ssub.s32 %s17, 2
        // Predicated region
        $region81: #{tpu_custom_call.1} parent=79 // pred_check
          %p1705 = pneg %p308
        $region82: #{tpu_custom_call.1} parent=79 // pred_check_branch
          %1707 = sbr.rel (%p1705) target = $region84
        $region83: #{tpu_custom_call.1} parent=79 // pred_region
          %p1708 = scmp.lt.s32.totalorder %s28, 1
          %s1709 = scalar_select %p1708, %s28, 1
          %s1710 = smul.addr %s1709, 8
          %s1711 = smul.addr %s1710, 8
          %s1712 = scalar_lea.vmem %s10, %s1711
        $region84: #{tpu_custom_call.1} parent=79 // pred_fallthru
          _
      $region80: #{tpu_custom_call.1} parent=5 // pred_fallthru
        _
    $region6: #{tpu_custom_call.1} parent=1 // loop_footer
      %s21 = sadd.s32 1, %s17
    $region7: #{tpu_custom_call.1} parent=1 // loop_footer_branch
      %16 = sbr.rel target = $region3
    $region8: #{tpu_custom_call.1} parent=1 // loop_exit
      _
    %1713 = vsyncpa [#allocation3], 1
    %s1714 = scalar_lea.sflag [#allocation3], 1
    %1715 = vsyncpa %s1714, 1

</llo_original>
